<compile_context>
chip_gen: v7x
topology: tpu7x:2x2x1
jax: 0.10.0
libtpu: 0.0.40
codegen_flags: <defaults>
</compile_context>

<pallas_src>
import numpy as np
import jax
import jax.numpy as jnp
from jax import lax
from jax.experimental import pallas as pl
from jax.experimental.pallas import tpu as pltpu


def _make_filter_bank(sr, n_bands, num_taps):
    """Kaiser-windowed sinc band-pass filter bank approximating
    `sinc -a 120 band_start-band_end` for each of the n_bands bands."""
    eps = 1e-7
    band_width = sr / 2.0 / n_bands
    m = (num_taps - 1) / 2.0
    n = np.arange(num_taps) - m
    # 120 dB stop-band attenuation -> Kaiser beta = 0.1102 * (A - 8.7)
    beta = 0.1102 * (120.0 - 8.7)
    win = np.kaiser(num_taps, beta)

    def ideal_lowpass(fc_hz):
        fc = fc_hz / sr  # normalized cutoff (cycles / sample)
        return 2.0 * fc * np.sinc(2.0 * fc * n)

    filters = []
    for i in range(n_bands):
        lo = i * band_width
        hi = (i + 1) * band_width
        if i == n_bands - 1:
            hi -= eps
        h = (ideal_lowpass(hi) - ideal_lowpass(lo)) * win
        filters.append(h)
    return np.stack(filters).astype(np.float32)  # [n_bands, num_taps]


def _round_up(a, b):
    return (a + b - 1) // b * b


def augment_forward(x, sr, n_bands, num_taps=63, chunk=512, t_tile_target=8192):
    """Pallas equivalent of Augment.forward.

    :param x: [Batch, 1, Time] float32
    :return:  [Batch * n_bands, 1, Time]  (matches torch.cat(bands, dim=0)
              of per-band [Batch, 1, Time] outputs, band-major)
    """
    assert x.ndim == 3 and x.shape[1] == 1
    batch, _, time = x.shape
    rows = n_bands * batch

    h = _make_filter_bank(sr, n_bands, num_taps)                 # [n_bands, L]
    # Band-major tap table: row (band*batch + b) holds h[band].
    h_rows = jnp.asarray(np.repeat(h, batch, axis=0))            # [rows, L]

    # --- time tiling geometry -------------------------------------------------
    t_tile = _round_up(min(t_tile_target, _round_up(time, chunk)), chunk)
    t_padded = _round_up(time, t_tile)
    num_tiles = t_padded // t_tile
    n_chunks = t_tile // chunk
    halo = _round_up(num_taps - 1, 128)      # aligned halo (>= L-1), unmasked loads
    win = t_tile + halo                      # per-tile input window length

    pad_left = (num_taps - 1) // 2
    x2d = x[:, 0, :].astype(jnp.float32)                          # [B, T]
    x_pad = jnp.pad(x2d, ((0, 0),
                          (pad_left, (t_padded + halo) - pad_left - time)))

    # Haloed windows, one per time tile, with band-major replicated rows
    # (layout plumbing so kernel blocks are non-overlapping & lane/sublane dense).
    x_windows = jnp.stack(
        [x_pad[:, s:s + win] for s in range(0, t_padded, t_tile)], axis=0)  # [nt, B, win]
    x_windows = jnp.tile(x_windows, (1, n_bands, 1))              # [nt, rows, win]

    def kernel(h_ref, x_ref, o_ref):
        # h_ref: VMEM [rows, num_taps]  band-major tap columns (resident block)
        # x_ref: VMEM [rows, win]       this tile's haloed, band-replicated input
        # o_ref: VMEM [rows, t_tile]    band-major, lane-dense output slab
        hh = h_ref[...]                                           # [rows, L] (1 vreg)

        def chunk_body(c, carry):
            base = pl.multiple_of(c * chunk, chunk)
            xwin = x_ref[:, pl.ds(base, chunk + halo)]            # [rows, chunk+halo]
            acc0 = jnp.zeros((rows, chunk), jnp.float32)
            acc1 = jnp.zeros((rows, chunk), jnp.float32)
            # Static unroll over taps: static lane slices of the window (XLU)
            # times a [rows,1] tap column lane-broadcast (VPU MAC).
            for tap in range(num_taps):
                term = xwin[:, tap:tap + chunk] * hh[:, tap:tap + 1]
                if tap % 2 == 0:
                    acc0 = acc0 + term
                else:
                    acc1 = acc1 + term
            o_ref[:, pl.ds(base, chunk)] = acc0 + acc1
            return carry

        lax.fori_loop(0, n_chunks, chunk_body, 0)

    out = pl.pallas_call(
        kernel,
        out_shape=jax.ShapeDtypeStruct((rows, t_padded), jnp.float32),
        grid=(num_tiles,),
        in_specs=[
            pl.BlockSpec((rows, num_taps), lambda t: (0, 0)),     # tap table (resident)
            pl.BlockSpec((None, rows, win), lambda t: (t, 0, 0)),  # per-tile window
        ],
        out_specs=pl.BlockSpec((rows, t_tile), lambda t: (0, t)),
        compiler_params=pltpu.CompilerParams(
            dimension_semantics=("parallel",),       # time tiles are independent
            vmem_limit_bytes=32 * 1024 * 1024),
    )(h_rows, x_windows)

    # torch.cat(bands, dim=0): band-major stack of [Batch, 1, Time] chunks.
    return out[:, :time].reshape(rows, 1, time)


if __name__ == "__main__":
    sr = 16000
    n_bands = 4
    batch, time = 2, 256
    num_taps = 63

    key = jax.random.PRNGKey(0)
    x = jax.random.normal(key, (batch, 1, time), dtype=jnp.float32)

    y = augment_forward(x, sr, n_bands, num_taps=num_taps)
    y = jax.block_until_ready(y)
    assert y.shape == (batch * n_bands, 1, time)
    assert y.dtype == jnp.float32

    # Cross-check against a plain numpy reference of the same FIR bank.
    h = _make_filter_bank(sr, n_bands, num_taps)
    pad_left = (num_taps - 1) // 2
    pad_right = num_taps - 1 - pad_left
    xp = np.pad(np.asarray(x[:, 0, :]), ((0, 0), (pad_left, pad_right)))
    ref = np.stack(
        [sum(xp[:, tap:tap + time] * h[band, tap] for tap in range(num_taps))
         for band in range(n_bands)], axis=0)                    # [n_bands, B, T]
    ref = ref.reshape(n_bands * batch, 1, time).astype(np.float32)
    np.testing.assert_allclose(np.asarray(y), ref, rtol=1e-3, atol=1e-4)

    print("KERNEL_OK")
</pallas_src>

<mosaic_0001>
module attributes {stable_mosaic.version = 11 : i64} {
  func.func @kernel(%arg0: i32, %arg1: memref<8x63xf32, #tpu.memory_space<vmem>>, %arg2: memref<1x8x640xf32, #tpu.memory_space<vmem>>, %arg3: memref<8x512xf32, #tpu.memory_space<vmem>>) attributes {dimension_semantics = [#tpu.dimension_semantics<parallel>], iteration_bounds = array<i64: 1>, scalar_prefetch = 0 : i64, scratch_operands = 0 : i64, tpu.core_type = #tpu.core_type<tc>, window_params = [{pipeline_mode = #tpu.pipeline_mode<synchronous>, transform_indices = @transform_0, window_bounds = array<i64: 8, 63>}, {transform_indices = @transform_1, window_bounds = array<i64: 1, 8, 640>}, {transform_indices = @transform_2, window_bounds = array<i64: 8, 512>}]} {
    %c0 = arith.constant 0 : index
    %c0_0 = arith.constant 0 : index
    %0 = vector.load %arg1[%c0, %c0_0] : memref<8x63xf32, #tpu.memory_space<vmem>>, vector<8x63xf32>
    %c0_i32 = arith.constant 0 : i32
    %c512_i32 = arith.constant 512 : i32
    %1 = arith.muli %c0_i32, %c512_i32 : i32
    %2 = tpu.assume_multiple %1, 512 : i32
    %c0_1 = arith.constant 0 : index
    %c0_2 = arith.constant 0 : index
    %3 = arith.index_cast %2 : i32 to index
    %4 = vector.load %arg2[%c0_1, %c0_2, %3] : memref<1x8x640xf32, #tpu.memory_space<vmem>>, vector<1x8x640xf32>
    %5 = vector.shape_cast %4 : vector<1x8x640xf32> to vector<8x640xf32>
    %cst = arith.constant 0.000000e+00 : f32
    %6 = vector.broadcast %cst : f32 to vector<8x512xf32>
    %cst_3 = arith.constant 0.000000e+00 : f32
    %7 = vector.broadcast %cst_3 : f32 to vector<8x512xf32>
    %8 = vector.extract_strided_slice %5 {offsets = [0, 0], sizes = [8, 512], strides = [1, 1]} : vector<8x640xf32> to vector<8x512xf32>
    %9 = vector.extract_strided_slice %0 {offsets = [0, 0], sizes = [8, 1], strides = [1, 1]} : vector<8x63xf32> to vector<8x1xf32>
    %10 = vector.broadcast %9 : vector<8x1xf32> to vector<8x512xf32>
    %11 = arith.mulf %8, %10 : vector<8x512xf32>
    %12 = arith.addf %6, %11 : vector<8x512xf32>
    %13 = vector.extract_strided_slice %5 {offsets = [0, 1], sizes = [8, 512], strides = [1, 1]} : vector<8x640xf32> to vector<8x512xf32>
    %14 = vector.extract_strided_slice %0 {offsets = [0, 1], sizes = [8, 1], strides = [1, 1]} : vector<8x63xf32> to vector<8x1xf32>
    %15 = vector.broadcast %14 : vector<8x1xf32> to vector<8x512xf32>
    %16 = arith.mulf %13, %15 : vector<8x512xf32>
    %17 = arith.addf %7, %16 : vector<8x512xf32>
    %18 = vector.extract_strided_slice %5 {offsets = [0, 2], sizes = [8, 512], strides = [1, 1]} : vector<8x640xf32> to vector<8x512xf32>
    %19 = vector.extract_strided_slice %0 {offsets = [0, 2], sizes = [8, 1], strides = [1, 1]} : vector<8x63xf32> to vector<8x1xf32>
    %20 = vector.broadcast %19 : vector<8x1xf32> to vector<8x512xf32>
    %21 = arith.mulf %18, %20 : vector<8x512xf32>
    %22 = arith.addf %12, %21 : vector<8x512xf32>
    %23 = vector.extract_strided_slice %5 {offsets = [0, 3], sizes = [8, 512], strides = [1, 1]} : vector<8x640xf32> to vector<8x512xf32>
    %24 = vector.extract_strided_slice %0 {offsets = [0, 3], sizes = [8, 1], strides = [1, 1]} : vector<8x63xf32> to vector<8x1xf32>
    %25 = vector.broadcast %24 : vector<8x1xf32> to vector<8x512xf32>
    %26 = arith.mulf %23, %25 : vector<8x512xf32>
    %27 = arith.addf %17, %26 : vector<8x512xf32>
    %28 = vector.extract_strided_slice %5 {offsets = [0, 4], sizes = [8, 512], strides = [1, 1]} : vector<8x640xf32> to vector<8x512xf32>
    %29 = vector.extract_strided_slice %0 {offsets = [0, 4], sizes = [8, 1], strides = [1, 1]} : vector<8x63xf32> to vector<8x1xf32>
    %30 = vector.broadcast %29 : vector<8x1xf32> to vector<8x512xf32>
    %31 = arith.mulf %28, %30 : vector<8x512xf32>
    %32 = arith.addf %22, %31 : vector<8x512xf32>
    %33 = vector.extract_strided_slice %5 {offsets = [0, 5], sizes = [8, 512], strides = [1, 1]} : vector<8x640xf32> to vector<8x512xf32>
    %34 = vector.extract_strided_slice %0 {offsets = [0, 5], sizes = [8, 1], strides = [1, 1]} : vector<8x63xf32> to vector<8x1xf32>
    %35 = vector.broadcast %34 : vector<8x1xf32> to vector<8x512xf32>
    %36 = arith.mulf %33, %35 : vector<8x512xf32>
    %37 = arith.addf %27, %36 : vector<8x512xf32>
    %38 = vector.extract_strided_slice %5 {offsets = [0, 6], sizes = [8, 512], strides = [1, 1]} : vector<8x640xf32> to vector<8x512xf32>
    %39 = vector.extract_strided_slice %0 {offsets = [0, 6], sizes = [8, 1], strides = [1, 1]} : vector<8x63xf32> to vector<8x1xf32>
    %40 = vector.broadcast %39 : vector<8x1xf32> to vector<8x512xf32>
    %41 = arith.mulf %38, %40 : vector<8x512xf32>
    %42 = arith.addf %32, %41 : vector<8x512xf32>
    %43 = vector.extract_strided_slice %5 {offsets = [0, 7], sizes = [8, 512], strides = [1, 1]} : vector<8x640xf32> to vector<8x512xf32>
    %44 = vector.extract_strided_slice %0 {offsets = [0, 7], sizes = [8, 1], strides = [1, 1]} : vector<8x63xf32> to vector<8x1xf32>
    %45 = vector.broadcast %44 : vector<8x1xf32> to vector<8x512xf32>
    %46 = arith.mulf %43, %45 : vector<8x512xf32>
    %47 = arith.addf %37, %46 : vector<8x512xf32>
    %48 = vector.extract_strided_slice %5 {offsets = [0, 8], sizes = [8, 512], strides = [1, 1]} : vector<8x640xf32> to vector<8x512xf32>
    %49 = vector.extract_strided_slice %0 {offsets = [0, 8], sizes = [8, 1], strides = [1, 1]} : vector<8x63xf32> to vector<8x1xf32>
    %50 = vector.broadcast %49 : vector<8x1xf32> to vector<8x512xf32>
    %51 = arith.mulf %48, %50 : vector<8x512xf32>
    %52 = arith.addf %42, %51 : vector<8x512xf32>
    %53 = vector.extract_strided_slice %5 {offsets = [0, 9], sizes = [8, 512], strides = [1, 1]} : vector<8x640xf32> to vector<8x512xf32>
    %54 = vector.extract_strided_slice %0 {offsets = [0, 9], sizes = [8, 1], strides = [1, 1]} : vector<8x63xf32> to vector<8x1xf32>
    %55 = vector.broadcast %54 : vector<8x1xf32> to vector<8x512xf32>
    %56 = arith.mulf %53, %55 : vector<8x512xf32>
    %57 = arith.addf %47, %56 : vector<8x512xf32>
    %58 = vector.extract_strided_slice %5 {offsets = [0, 10], sizes = [8, 512], strides = [1, 1]} : vector<8x640xf32> to vector<8x512xf32>
    %59 = vector.extract_strided_slice %0 {offsets = [0, 10], sizes = [8, 1], strides = [1, 1]} : vector<8x63xf32> to vector<8x1xf32>
    %60 = vector.broadcast %59 : vector<8x1xf32> to vector<8x512xf32>
    %61 = arith.mulf %58, %60 : vector<8x512xf32>
    %62 = arith.addf %52, %61 : vector<8x512xf32>
    %63 = vector.extract_strided_slice %5 {offsets = [0, 11], sizes = [8, 512], strides = [1, 1]} : vector<8x640xf32> to vector<8x512xf32>
    %64 = vector.extract_strided_slice %0 {offsets = [0, 11], sizes = [8, 1], strides = [1, 1]} : vector<8x63xf32> to vector<8x1xf32>
    %65 = vector.broadcast %64 : vector<8x1xf32> to vector<8x512xf32>
    %66 = arith.mulf %63, %65 : vector<8x512xf32>
    %67 = arith.addf %57, %66 : vector<8x512xf32>
    %68 = vector.extract_strided_slice %5 {offsets = [0, 12], sizes = [8, 512], strides = [1, 1]} : vector<8x640xf32> to vector<8x512xf32>
    %69 = vector.extract_strided_slice %0 {offsets = [0, 12], sizes = [8, 1], strides = [1, 1]} : vector<8x63xf32> to vector<8x1xf32>
    %70 = vector.broadcast %69 : vector<8x1xf32> to vector<8x512xf32>
    %71 = arith.mulf %68, %70 : vector<8x512xf32>
    %72 = arith.addf %62, %71 : vector<8x512xf32>
    %73 = vector.extract_strided_slice %5 {offsets = [0, 13], sizes = [8, 512], strides = [1, 1]} : vector<8x640xf32> to vector<8x512xf32>
    %74 = vector.extract_strided_slice %0 {offsets = [0, 13], sizes = [8, 1], strides = [1, 1]} : vector<8x63xf32> to vector<8x1xf32>
    %75 = vector.broadcast %74 : vector<8x1xf32> to vector<8x512xf32>
    %76 = arith.mulf %73, %75 : vector<8x512xf32>
    %77 = arith.addf %67, %76 : vector<8x512xf32>
    %78 = vector.extract_strided_slice %5 {offsets = [0, 14], sizes = [8, 512], strides = [1, 1]} : vector<8x640xf32> to vector<8x512xf32>
    %79 = vector.extract_strided_slice %0 {offsets = [0, 14], sizes = [8, 1], strides = [1, 1]} : vector<8x63xf32> to vector<8x1xf32>
    %80 = vector.broadcast %79 : vector<8x1xf32> to vector<8x512xf32>
    %81 = arith.mulf %78, %80 : vector<8x512xf32>
    %82 = arith.addf %72, %81 : vector<8x512xf32>
    %83 = vector.extract_strided_slice %5 {offsets = [0, 15], sizes = [8, 512], strides = [1, 1]} : vector<8x640xf32> to vector<8x512xf32>
    %84 = vector.extract_strided_slice %0 {offsets = [0, 15], sizes = [8, 1], strides = [1, 1]} : vector<8x63xf32> to vector<8x1xf32>
    %85 = vector.broadcast %84 : vector<8x1xf32> to vector<8x512xf32>
    %86 = arith.mulf %83, %85 : vector<8x512xf32>
    %87 = arith.addf %77, %86 : vector<8x512xf32>
    %88 = vector.extract_strided_slice %5 {offsets = [0, 16], sizes = [8, 512], strides = [1, 1]} : vector<8x640xf32> to vector<8x512xf32>
    %89 = vector.extract_strided_slice %0 {offsets = [0, 16], sizes = [8, 1], strides = [1, 1]} : vector<8x63xf32> to vector<8x1xf32>
    %90 = vector.broadcast %89 : vector<8x1xf32> to vector<8x512xf32>
    %91 = arith.mulf %88, %90 : vector<8x512xf32>
    %92 = arith.addf %82, %91 : vector<8x512xf32>
    %93 = vector.extract_strided_slice %5 {offsets = [0, 17], sizes = [8, 512], strides = [1, 1]} : vector<8x640xf32> to vector<8x512xf32>
    %94 = vector.extract_strided_slice %0 {offsets = [0, 17], sizes = [8, 1], strides = [1, 1]} : vector<8x63xf32> to vector<8x1xf32>
    %95 = vector.broadcast %94 : vector<8x1xf32> to vector<8x512xf32>
    %96 = arith.mulf %93, %95 : vector<8x512xf32>
    %97 = arith.addf %87, %96 : vector<8x512xf32>
    %98 = vector.extract_strided_slice %5 {offsets = [0, 18], sizes = [8, 512], strides = [1, 1]} : vector<8x640xf32> to vector<8x512xf32>
    %99 = vector.extract_strided_slice %0 {offsets = [0, 18], sizes = [8, 1], strides = [1, 1]} : vector<8x63xf32> to vector<8x1xf32>
    %100 = vector.broadcast %99 : vector<8x1xf32> to vector<8x512xf32>
    %101 = arith.mulf %98, %100 : vector<8x512xf32>
    %102 = arith.addf %92, %101 : vector<8x512xf32>
    %103 = vector.extract_strided_slice %5 {offsets = [0, 19], sizes = [8, 512], strides = [1, 1]} : vector<8x640xf32> to vector<8x512xf32>
    %104 = vector.extract_strided_slice %0 {offsets = [0, 19], sizes = [8, 1], strides = [1, 1]} : vector<8x63xf32> to vector<8x1xf32>
    %105 = vector.broadcast %104 : vector<8x1xf32> to vector<8x512xf32>
    %106 = arith.mulf %103, %105 : vector<8x512xf32>
    %107 = arith.addf %97, %106 : vector<8x512xf32>
    %108 = vector.extract_strided_slice %5 {offsets = [0, 20], sizes = [8, 512], strides = [1, 1]} : vector<8x640xf32> to vector<8x512xf32>
    %109 = vector.extract_strided_slice %0 {offsets = [0, 20], sizes = [8, 1], strides = [1, 1]} : vector<8x63xf32> to vector<8x1xf32>
    %110 = vector.broadcast %109 : vector<8x1xf32> to vector<8x512xf32>
    %111 = arith.mulf %108, %110 : vector<8x512xf32>
    %112 = arith.addf %102, %111 : vector<8x512xf32>
    %113 = vector.extract_strided_slice %5 {offsets = [0, 21], sizes = [8, 512], strides = [1, 1]} : vector<8x640xf32> to vector<8x512xf32>
    %114 = vector.extract_strided_slice %0 {offsets = [0, 21], sizes = [8, 1], strides = [1, 1]} : vector<8x63xf32> to vector<8x1xf32>
    %115 = vector.broadcast %114 : vector<8x1xf32> to vector<8x512xf32>
    %116 = arith.mulf %113, %115 : vector<8x512xf32>
    %117 = arith.addf %107, %116 : vector<8x512xf32>
    %118 = vector.extract_strided_slice %5 {offsets = [0, 22], sizes = [8, 512], strides = [1, 1]} : vector<8x640xf32> to vector<8x512xf32>
    %119 = vector.extract_strided_slice %0 {offsets = [0, 22], sizes = [8, 1], strides = [1, 1]} : vector<8x63xf32> to vector<8x1xf32>
    %120 = vector.broadcast %119 : vector<8x1xf32> to vector<8x512xf32>
    %121 = arith.mulf %118, %120 : vector<8x512xf32>
    %122 = arith.addf %112, %121 : vector<8x512xf32>
    %123 = vector.extract_strided_slice %5 {offsets = [0, 23], sizes = [8, 512], strides = [1, 1]} : vector<8x640xf32> to vector<8x512xf32>
    %124 = vector.extract_strided_slice %0 {offsets = [0, 23], sizes = [8, 1], strides = [1, 1]} : vector<8x63xf32> to vector<8x1xf32>
    %125 = vector.broadcast %124 : vector<8x1xf32> to vector<8x512xf32>
    %126 = arith.mulf %123, %125 : vector<8x512xf32>
    %127 = arith.addf %117, %126 : vector<8x512xf32>
    %128 = vector.extract_strided_slice %5 {offsets = [0, 24], sizes = [8, 512], strides = [1, 1]} : vector<8x640xf32> to vector<8x512xf32>
    %129 = vector.extract_strided_slice %0 {offsets = [0, 24], sizes = [8, 1], strides = [1, 1]} : vector<8x63xf32> to vector<8x1xf32>
    %130 = vector.broadcast %129 : vector<8x1xf32> to vector<8x512xf32>
    %131 = arith.mulf %128, %130 : vector<8x512xf32>
    %132 = arith.addf %122, %131 : vector<8x512xf32>
    %133 = vector.extract_strided_slice %5 {offsets = [0, 25], sizes = [8, 512], strides = [1, 1]} : vector<8x640xf32> to vector<8x512xf32>
    %134 = vector.extract_strided_slice %0 {offsets = [0, 25], sizes = [8, 1], strides = [1, 1]} : vector<8x63xf32> to vector<8x1xf32>
    %135 = vector.broadcast %134 : vector<8x1xf32> to vector<8x512xf32>
    %136 = arith.mulf %133, %135 : vector<8x512xf32>
    %137 = arith.addf %127, %136 : vector<8x512xf32>
    %138 = vector.extract_strided_slice %5 {offsets = [0, 26], sizes = [8, 512], strides = [1, 1]} : vector<8x640xf32> to vector<8x512xf32>
    %139 = vector.extract_strided_slice %0 {offsets = [0, 26], sizes = [8, 1], strides = [1, 1]} : vector<8x63xf32> to vector<8x1xf32>
    %140 = vector.broadcast %139 : vector<8x1xf32> to vector<8x512xf32>
    %141 = arith.mulf %138, %140 : vector<8x512xf32>
    %142 = arith.addf %132, %141 : vector<8x512xf32>
    %143 = vector.extract_strided_slice %5 {offsets = [0, 27], sizes = [8, 512], strides = [1, 1]} : vector<8x640xf32> to vector<8x512xf32>
    %144 = vector.extract_strided_slice %0 {offsets = [0, 27], sizes = [8, 1], strides = [1, 1]} : vector<8x63xf32> to vector<8x1xf32>
    %145 = vector.broadcast %144 : vector<8x1xf32> to vector<8x512xf32>
    %146 = arith.mulf %143, %145 : vector<8x512xf32>
    %147 = arith.addf %137, %146 : vector<8x512xf32>
    %148 = vector.extract_strided_slice %5 {offsets = [0, 28], sizes = [8, 512], strides = [1, 1]} : vector<8x640xf32> to vector<8x512xf32>
    %149 = vector.extract_strided_slice %0 {offsets = [0, 28], sizes = [8, 1], strides = [1, 1]} : vector<8x63xf32> to vector<8x1xf32>
    %150 = vector.broadcast %149 : vector<8x1xf32> to vector<8x512xf32>
    %151 = arith.mulf %148, %150 : vector<8x512xf32>
    %152 = arith.addf %142, %151 : vector<8x512xf32>
    %153 = vector.extract_strided_slice %5 {offsets = [0, 29], sizes = [8, 512], strides = [1, 1]} : vector<8x640xf32> to vector<8x512xf32>
    %154 = vector.extract_strided_slice %0 {offsets = [0, 29], sizes = [8, 1], strides = [1, 1]} : vector<8x63xf32> to vector<8x1xf32>
    %155 = vector.broadcast %154 : vector<8x1xf32> to vector<8x512xf32>
    %156 = arith.mulf %153, %155 : vector<8x512xf32>
    %157 = arith.addf %147, %156 : vector<8x512xf32>
    %158 = vector.extract_strided_slice %5 {offsets = [0, 30], sizes = [8, 512], strides = [1, 1]} : vector<8x640xf32> to vector<8x512xf32>
    %159 = vector.extract_strided_slice %0 {offsets = [0, 30], sizes = [8, 1], strides = [1, 1]} : vector<8x63xf32> to vector<8x1xf32>
    %160 = vector.broadcast %159 : vector<8x1xf32> to vector<8x512xf32>
    %161 = arith.mulf %158, %160 : vector<8x512xf32>
    %162 = arith.addf %152, %161 : vector<8x512xf32>
    %163 = vector.extract_strided_slice %5 {offsets = [0, 31], sizes = [8, 512], strides = [1, 1]} : vector<8x640xf32> to vector<8x512xf32>
    %164 = vector.extract_strided_slice %0 {offsets = [0, 31], sizes = [8, 1], strides = [1, 1]} : vector<8x63xf32> to vector<8x1xf32>
    %165 = vector.broadcast %164 : vector<8x1xf32> to vector<8x512xf32>
    %166 = arith.mulf %163, %165 : vector<8x512xf32>
    %167 = arith.addf %157, %166 : vector<8x512xf32>
    %168 = vector.extract_strided_slice %5 {offsets = [0, 32], sizes = [8, 512], strides = [1, 1]} : vector<8x640xf32> to vector<8x512xf32>
    %169 = vector.extract_strided_slice %0 {offsets = [0, 32], sizes = [8, 1], strides = [1, 1]} : vector<8x63xf32> to vector<8x1xf32>
    %170 = vector.broadcast %169 : vector<8x1xf32> to vector<8x512xf32>
    %171 = arith.mulf %168, %170 : vector<8x512xf32>
    %172 = arith.addf %162, %171 : vector<8x512xf32>
    %173 = vector.extract_strided_slice %5 {offsets = [0, 33], sizes = [8, 512], strides = [1, 1]} : vector<8x640xf32> to vector<8x512xf32>
    %174 = vector.extract_strided_slice %0 {offsets = [0, 33], sizes = [8, 1], strides = [1, 1]} : vector<8x63xf32> to vector<8x1xf32>
    %175 = vector.broadcast %174 : vector<8x1xf32> to vector<8x512xf32>
    %176 = arith.mulf %173, %175 : vector<8x512xf32>
    %177 = arith.addf %167, %176 : vector<8x512xf32>
    %178 = vector.extract_strided_slice %5 {offsets = [0, 34], sizes = [8, 512], strides = [1, 1]} : vector<8x640xf32> to vector<8x512xf32>
    %179 = vector.extract_strided_slice %0 {offsets = [0, 34], sizes = [8, 1], strides = [1, 1]} : vector<8x63xf32> to vector<8x1xf32>
    %180 = vector.broadcast %179 : vector<8x1xf32> to vector<8x512xf32>
    %181 = arith.mulf %178, %180 : vector<8x512xf32>
    %182 = arith.addf %172, %181 : vector<8x512xf32>
    %183 = vector.extract_strided_slice %5 {offsets = [0, 35], sizes = [8, 512], strides = [1, 1]} : vector<8x640xf32> to vector<8x512xf32>
    %184 = vector.extract_strided_slice %0 {offsets = [0, 35], sizes = [8, 1], strides = [1, 1]} : vector<8x63xf32> to vector<8x1xf32>
    %185 = vector.broadcast %184 : vector<8x1xf32> to vector<8x512xf32>
    %186 = arith.mulf %183, %185 : vector<8x512xf32>
    %187 = arith.addf %177, %186 : vector<8x512xf32>
    %188 = vector.extract_strided_slice %5 {offsets = [0, 36], sizes = [8, 512], strides = [1, 1]} : vector<8x640xf32> to vector<8x512xf32>
    %189 = vector.extract_strided_slice %0 {offsets = [0, 36], sizes = [8, 1], strides = [1, 1]} : vector<8x63xf32> to vector<8x1xf32>
    %190 = vector.broadcast %189 : vector<8x1xf32> to vector<8x512xf32>
    %191 = arith.mulf %188, %190 : vector<8x512xf32>
    %192 = arith.addf %182, %191 : vector<8x512xf32>
    %193 = vector.extract_strided_slice %5 {offsets = [0, 37], sizes = [8, 512], strides = [1, 1]} : vector<8x640xf32> to vector<8x512xf32>
    %194 = vector.extract_strided_slice %0 {offsets = [0, 37], sizes = [8, 1], strides = [1, 1]} : vector<8x63xf32> to vector<8x1xf32>
    %195 = vector.broadcast %194 : vector<8x1xf32> to vector<8x512xf32>
    %196 = arith.mulf %193, %195 : vector<8x512xf32>
    %197 = arith.addf %187, %196 : vector<8x512xf32>
    %198 = vector.extract_strided_slice %5 {offsets = [0, 38], sizes = [8, 512], strides = [1, 1]} : vector<8x640xf32> to vector<8x512xf32>
    %199 = vector.extract_strided_slice %0 {offsets = [0, 38], sizes = [8, 1], strides = [1, 1]} : vector<8x63xf32> to vector<8x1xf32>
    %200 = vector.broadcast %199 : vector<8x1xf32> to vector<8x512xf32>
    %201 = arith.mulf %198, %200 : vector<8x512xf32>
    %202 = arith.addf %192, %201 : vector<8x512xf32>
    %203 = vector.extract_strided_slice %5 {offsets = [0, 39], sizes = [8, 512], strides = [1, 1]} : vector<8x640xf32> to vector<8x512xf32>
    %204 = vector.extract_strided_slice %0 {offsets = [0, 39], sizes = [8, 1], strides = [1, 1]} : vector<8x63xf32> to vector<8x1xf32>
    %205 = vector.broadcast %204 : vector<8x1xf32> to vector<8x512xf32>
    %206 = arith.mulf %203, %205 : vector<8x512xf32>
    %207 = arith.addf %197, %206 : vector<8x512xf32>
    %208 = vector.extract_strided_slice %5 {offsets = [0, 40], sizes = [8, 512], strides = [1, 1]} : vector<8x640xf32> to vector<8x512xf32>
    %209 = vector.extract_strided_slice %0 {offsets = [0, 40], sizes = [8, 1], strides = [1, 1]} : vector<8x63xf32> to vector<8x1xf32>
    %210 = vector.broadcast %209 : vector<8x1xf32> to vector<8x512xf32>
    %211 = arith.mulf %208, %210 : vector<8x512xf32>
    %212 = arith.addf %202, %211 : vector<8x512xf32>
    %213 = vector.extract_strided_slice %5 {offsets = [0, 41], sizes = [8, 512], strides = [1, 1]} : vector<8x640xf32> to vector<8x512xf32>
    %214 = vector.extract_strided_slice %0 {offsets = [0, 41], sizes = [8, 1], strides = [1, 1]} : vector<8x63xf32> to vector<8x1xf32>
    %215 = vector.broadcast %214 : vector<8x1xf32> to vector<8x512xf32>
    %216 = arith.mulf %213, %215 : vector<8x512xf32>
    %217 = arith.addf %207, %216 : vector<8x512xf32>
    %218 = vector.extract_strided_slice %5 {offsets = [0, 42], sizes = [8, 512], strides = [1, 1]} : vector<8x640xf32> to vector<8x512xf32>
    %219 = vector.extract_strided_slice %0 {offsets = [0, 42], sizes = [8, 1], strides = [1, 1]} : vector<8x63xf32> to vector<8x1xf32>
    %220 = vector.broadcast %219 : vector<8x1xf32> to vector<8x512xf32>
    %221 = arith.mulf %218, %220 : vector<8x512xf32>
    %222 = arith.addf %212, %221 : vector<8x512xf32>
    %223 = vector.extract_strided_slice %5 {offsets = [0, 43], sizes = [8, 512], strides = [1, 1]} : vector<8x640xf32> to vector<8x512xf32>
    %224 = vector.extract_strided_slice %0 {offsets = [0, 43], sizes = [8, 1], strides = [1, 1]} : vector<8x63xf32> to vector<8x1xf32>
    %225 = vector.broadcast %224 : vector<8x1xf32> to vector<8x512xf32>
    %226 = arith.mulf %223, %225 : vector<8x512xf32>
    %227 = arith.addf %217, %226 : vector<8x512xf32>
    %228 = vector.extract_strided_slice %5 {offsets = [0, 44], sizes = [8, 512], strides = [1, 1]} : vector<8x640xf32> to vector<8x512xf32>
    %229 = vector.extract_strided_slice %0 {offsets = [0, 44], sizes = [8, 1], strides = [1, 1]} : vector<8x63xf32> to vector<8x1xf32>
    %230 = vector.broadcast %229 : vector<8x1xf32> to vector<8x512xf32>
    %231 = arith.mulf %228, %230 : vector<8x512xf32>
    %232 = arith.addf %222, %231 : vector<8x512xf32>
    %233 = vector.extract_strided_slice %5 {offsets = [0, 45], sizes = [8, 512], strides = [1, 1]} : vector<8x640xf32> to vector<8x512xf32>
    %234 = vector.extract_strided_slice %0 {offsets = [0, 45], sizes = [8, 1], strides = [1, 1]} : vector<8x63xf32> to vector<8x1xf32>
    %235 = vector.broadcast %234 : vector<8x1xf32> to vector<8x512xf32>
    %236 = arith.mulf %233, %235 : vector<8x512xf32>
    %237 = arith.addf %227, %236 : vector<8x512xf32>
    %238 = vector.extract_strided_slice %5 {offsets = [0, 46], sizes = [8, 512], strides = [1, 1]} : vector<8x640xf32> to vector<8x512xf32>
    %239 = vector.extract_strided_slice %0 {offsets = [0, 46], sizes = [8, 1], strides = [1, 1]} : vector<8x63xf32> to vector<8x1xf32>
    %240 = vector.broadcast %239 : vector<8x1xf32> to vector<8x512xf32>
    %241 = arith.mulf %238, %240 : vector<8x512xf32>
    %242 = arith.addf %232, %241 : vector<8x512xf32>
    %243 = vector.extract_strided_slice %5 {offsets = [0, 47], sizes = [8, 512], strides = [1, 1]} : vector<8x640xf32> to vector<8x512xf32>
    %244 = vector.extract_strided_slice %0 {offsets = [0, 47], sizes = [8, 1], strides = [1, 1]} : vector<8x63xf32> to vector<8x1xf32>
    %245 = vector.broadcast %244 : vector<8x1xf32> to vector<8x512xf32>
    %246 = arith.mulf %243, %245 : vector<8x512xf32>
    %247 = arith.addf %237, %246 : vector<8x512xf32>
    %248 = vector.extract_strided_slice %5 {offsets = [0, 48], sizes = [8, 512], strides = [1, 1]} : vector<8x640xf32> to vector<8x512xf32>
    %249 = vector.extract_strided_slice %0 {offsets = [0, 48], sizes = [8, 1], strides = [1, 1]} : vector<8x63xf32> to vector<8x1xf32>
    %250 = vector.broadcast %249 : vector<8x1xf32> to vector<8x512xf32>
    %251 = arith.mulf %248, %250 : vector<8x512xf32>
    %252 = arith.addf %242, %251 : vector<8x512xf32>
    %253 = vector.extract_strided_slice %5 {offsets = [0, 49], sizes = [8, 512], strides = [1, 1]} : vector<8x640xf32> to vector<8x512xf32>
    %254 = vector.extract_strided_slice %0 {offsets = [0, 49], sizes = [8, 1], strides = [1, 1]} : vector<8x63xf32> to vector<8x1xf32>
    %255 = vector.broadcast %254 : vector<8x1xf32> to vector<8x512xf32>
    %256 = arith.mulf %253, %255 : vector<8x512xf32>
    %257 = arith.addf %247, %256 : vector<8x512xf32>
    %258 = vector.extract_strided_slice %5 {offsets = [0, 50], sizes = [8, 512], strides = [1, 1]} : vector<8x640xf32> to vector<8x512xf32>
    %259 = vector.extract_strided_slice %0 {offsets = [0, 50], sizes = [8, 1], strides = [1, 1]} : vector<8x63xf32> to vector<8x1xf32>
    %260 = vector.broadcast %259 : vector<8x1xf32> to vector<8x512xf32>
    %261 = arith.mulf %258, %260 : vector<8x512xf32>
    %262 = arith.addf %252, %261 : vector<8x512xf32>
    %263 = vector.extract_strided_slice %5 {offsets = [0, 51], sizes = [8, 512], strides = [1, 1]} : vector<8x640xf32> to vector<8x512xf32>
    %264 = vector.extract_strided_slice %0 {offsets = [0, 51], sizes = [8, 1], strides = [1, 1]} : vector<8x63xf32> to vector<8x1xf32>
    %265 = vector.broadcast %264 : vector<8x1xf32> to vector<8x512xf32>
    %266 = arith.mulf %263, %265 : vector<8x512xf32>
    %267 = arith.addf %257, %266 : vector<8x512xf32>
    %268 = vector.extract_strided_slice %5 {offsets = [0, 52], sizes = [8, 512], strides = [1, 1]} : vector<8x640xf32> to vector<8x512xf32>
    %269 = vector.extract_strided_slice %0 {offsets = [0, 52], sizes = [8, 1], strides = [1, 1]} : vector<8x63xf32> to vector<8x1xf32>
    %270 = vector.broadcast %269 : vector<8x1xf32> to vector<8x512xf32>
    %271 = arith.mulf %268, %270 : vector<8x512xf32>
    %272 = arith.addf %262, %271 : vector<8x512xf32>
    %273 = vector.extract_strided_slice %5 {offsets = [0, 53], sizes = [8, 512], strides = [1, 1]} : vector<8x640xf32> to vector<8x512xf32>
    %274 = vector.extract_strided_slice %0 {offsets = [0, 53], sizes = [8, 1], strides = [1, 1]} : vector<8x63xf32> to vector<8x1xf32>
    %275 = vector.broadcast %274 : vector<8x1xf32> to vector<8x512xf32>
    %276 = arith.mulf %273, %275 : vector<8x512xf32>
    %277 = arith.addf %267, %276 : vector<8x512xf32>
    %278 = vector.extract_strided_slice %5 {offsets = [0, 54], sizes = [8, 512], strides = [1, 1]} : vector<8x640xf32> to vector<8x512xf32>
    %279 = vector.extract_strided_slice %0 {offsets = [0, 54], sizes = [8, 1], strides = [1, 1]} : vector<8x63xf32> to vector<8x1xf32>
    %280 = vector.broadcast %279 : vector<8x1xf32> to vector<8x512xf32>
    %281 = arith.mulf %278, %280 : vector<8x512xf32>
    %282 = arith.addf %272, %281 : vector<8x512xf32>
    %283 = vector.extract_strided_slice %5 {offsets = [0, 55], sizes = [8, 512], strides = [1, 1]} : vector<8x640xf32> to vector<8x512xf32>
    %284 = vector.extract_strided_slice %0 {offsets = [0, 55], sizes = [8, 1], strides = [1, 1]} : vector<8x63xf32> to vector<8x1xf32>
    %285 = vector.broadcast %284 : vector<8x1xf32> to vector<8x512xf32>
    %286 = arith.mulf %283, %285 : vector<8x512xf32>
    %287 = arith.addf %277, %286 : vector<8x512xf32>
    %288 = vector.extract_strided_slice %5 {offsets = [0, 56], sizes = [8, 512], strides = [1, 1]} : vector<8x640xf32> to vector<8x512xf32>
    %289 = vector.extract_strided_slice %0 {offsets = [0, 56], sizes = [8, 1], strides = [1, 1]} : vector<8x63xf32> to vector<8x1xf32>
    %290 = vector.broadcast %289 : vector<8x1xf32> to vector<8x512xf32>
    %291 = arith.mulf %288, %290 : vector<8x512xf32>
    %292 = arith.addf %282, %291 : vector<8x512xf32>
    %293 = vector.extract_strided_slice %5 {offsets = [0, 57], sizes = [8, 512], strides = [1, 1]} : vector<8x640xf32> to vector<8x512xf32>
    %294 = vector.extract_strided_slice %0 {offsets = [0, 57], sizes = [8, 1], strides = [1, 1]} : vector<8x63xf32> to vector<8x1xf32>
    %295 = vector.broadcast %294 : vector<8x1xf32> to vector<8x512xf32>
    %296 = arith.mulf %293, %295 : vector<8x512xf32>
    %297 = arith.addf %287, %296 : vector<8x512xf32>
    %298 = vector.extract_strided_slice %5 {offsets = [0, 58], sizes = [8, 512], strides = [1, 1]} : vector<8x640xf32> to vector<8x512xf32>
    %299 = vector.extract_strided_slice %0 {offsets = [0, 58], sizes = [8, 1], strides = [1, 1]} : vector<8x63xf32> to vector<8x1xf32>
    %300 = vector.broadcast %299 : vector<8x1xf32> to vector<8x512xf32>
    %301 = arith.mulf %298, %300 : vector<8x512xf32>
    %302 = arith.addf %292, %301 : vector<8x512xf32>
    %303 = vector.extract_strided_slice %5 {offsets = [0, 59], sizes = [8, 512], strides = [1, 1]} : vector<8x640xf32> to vector<8x512xf32>
    %304 = vector.extract_strided_slice %0 {offsets = [0, 59], sizes = [8, 1], strides = [1, 1]} : vector<8x63xf32> to vector<8x1xf32>
    %305 = vector.broadcast %304 : vector<8x1xf32> to vector<8x512xf32>
    %306 = arith.mulf %303, %305 : vector<8x512xf32>
    %307 = arith.addf %297, %306 : vector<8x512xf32>
    %308 = vector.extract_strided_slice %5 {offsets = [0, 60], sizes = [8, 512], strides = [1, 1]} : vector<8x640xf32> to vector<8x512xf32>
    %309 = vector.extract_strided_slice %0 {offsets = [0, 60], sizes = [8, 1], strides = [1, 1]} : vector<8x63xf32> to vector<8x1xf32>
    %310 = vector.broadcast %309 : vector<8x1xf32> to vector<8x512xf32>
    %311 = arith.mulf %308, %310 : vector<8x512xf32>
    %312 = arith.addf %302, %311 : vector<8x512xf32>
    %313 = vector.extract_strided_slice %5 {offsets = [0, 61], sizes = [8, 512], strides = [1, 1]} : vector<8x640xf32> to vector<8x512xf32>
    %314 = vector.extract_strided_slice %0 {offsets = [0, 61], sizes = [8, 1], strides = [1, 1]} : vector<8x63xf32> to vector<8x1xf32>
    %315 = vector.broadcast %314 : vector<8x1xf32> to vector<8x512xf32>
    %316 = arith.mulf %313, %315 : vector<8x512xf32>
    %317 = arith.addf %307, %316 : vector<8x512xf32>
    %318 = vector.extract_strided_slice %5 {offsets = [0, 62], sizes = [8, 512], strides = [1, 1]} : vector<8x640xf32> to vector<8x512xf32>
    %319 = vector.extract_strided_slice %0 {offsets = [0, 62], sizes = [8, 1], strides = [1, 1]} : vector<8x63xf32> to vector<8x1xf32>
    %320 = vector.broadcast %319 : vector<8x1xf32> to vector<8x512xf32>
    %321 = arith.mulf %318, %320 : vector<8x512xf32>
    %322 = arith.addf %312, %321 : vector<8x512xf32>
    %323 = arith.addf %322, %317 : vector<8x512xf32>
    %c0_4 = arith.constant 0 : index
    %324 = arith.index_cast %2 : i32 to index
    %325 = vector.load %arg3[%c0_4, %324] : memref<8x512xf32, #tpu.memory_space<vmem>>, vector<8x512xf32>
    tpu.vector_store %arg3[%c0_4, %324], %323 {strides = array<i32>} : memref<8x512xf32, #tpu.memory_space<vmem>>, vector<8x512xf32>,
    %c1_i32 = arith.constant 1 : i32
    return
  }
  func.func @transform_0(%arg0: i32) -> (i32, i32) {
    %c0_i32 = arith.constant 0 : i32
    %c0_i32_0 = arith.constant 0 : i32
    %c0_i32_1 = arith.constant 0 : i32
    return %c0_i32, %c0_i32_0 : i32, i32
  }
  func.func @transform_1(%arg0: i32) -> (i32, i32, i32) {
    %c0_i32 = arith.constant 0 : i32
    %c0_i32_0 = arith.constant 0 : i32
    %c0_i32_1 = arith.constant 0 : i32
    return %arg0, %c0_i32, %c0_i32_0 : i32, i32, i32
  }
  func.func @transform_2(%arg0: i32) -> (i32, i32) {
    %c0_i32 = arith.constant 0 : i32
    %c0_i32_0 = arith.constant 0 : i32
    return %c0_i32, %arg0 : i32, i32
  }
}

</mosaic_0001>

<llo_original>
// kernel: tpu_custom_call.1
$region0: #{tpu_custom_call.1}
  #allocation0 [shape = 'u32[]', space=smem, size = 0x4, offset = 0x4, fixed_abs, tag = 'smem constant byte address 0x4 - core index']
  #allocation1 [shape = 'u32[144,128]{1,0:T(1,128)}', space=vmem, size = 0x12000, scoped, tag = 'internal scratch']
  %s0 = inlined_call_operand.hbm [shape: f32[8,63], index: 0, kind: input, shape index: {}]
  %s1 = inlined_call_operand.hbm [shape: f32[1,8,640], index: 1, kind: input, shape index: {}]
  %s2 = inlined_call_operand.hbm [shape: f32[8,512], index: 2, kind: output, shape index: {}]
  %s3 = sld [smem:[#allocation0]]
  $region26: #{tpu_custom_call.1} parent=0
    _
  %s5 = ssub.s32 1, %s3
  %s6 = scalar_select 0, %s5, %s3
  $region1: #{tpu_custom_call.1} parent=0
    #allocation2 [shape = 'u8[4096]{0}', space=vmem, size = 0x1000, scoped, tag = 'input window, operand 0, single buffered']
    #allocation3 [shape = 's32[1]{0}', space=sflag, size = 0x4, scoped, tag = 'scoped memory for tpu_custom_call.1']
    #allocation4 [shape = 's32[1]{0}', space=sflag, size = 0x4, scoped, tag = 'scoped memory for tpu_custom_call.1']
    #allocation5 [shape = 'u8[20480]{0}', space=vmem, size = 0x5000, scoped, tag = 'input window, operand 1, single buffered']
    #allocation6 [shape = 's32[1]{0}', space=sflag, size = 0x4, scoped, tag = 'scoped memory for tpu_custom_call.1']
    #allocation7 [shape = 'u8[16384]{0}', space=vmem, size = 0x4000, scoped, tag = 'output window, operand 0, single buffered']
    %7 = vsyncpa [#allocation3], 0
    %8 = vsyncpa [#allocation6], 0
    %9 = vsyncpa [#allocation4], 0
    // Predicated region
    $region2: #{tpu_custom_call.1} parent=1 // pred_check
      _
    $region3: #{tpu_custom_call.1} parent=1 // pred_check_branch
      %11 = sbr.rel (0) target = $region5
    $region4: #{tpu_custom_call.1} parent=1 // pred_region
      %s13 = ssub.s32 128, 128
      %14 = vsyncadd [#allocation3], %s13
      %s16 = sshll.u32 [#allocation2], 4
      %s17 = int_to_ptr.vmem [resolvable:$true] %s16
      %19 = dma.hbm_to_vmem [thread:$0]  %s0, 128, %s17, [#allocation3]
    $region5: #{tpu_custom_call.1} parent=1 // pred_fallthru
      _
    // Predicated region
    $region6: #{tpu_custom_call.1} parent=1 // pred_check
      _
    $region7: #{tpu_custom_call.1} parent=1 // pred_check_branch
      %21 = sbr.rel (0) target = $region9
    $region8: #{tpu_custom_call.1} parent=1 // pred_region
      %s23 = ssub.s32 640, 640
      %24 = vsyncadd [#allocation6], %s23
      %s26 = sshll.u32 [#allocation5], 4
      %s27 = int_to_ptr.vmem [resolvable:$true] %s26
      %29 = dma.hbm_to_vmem [thread:$0]  %s1, 640, %s27, [#allocation6]
    $region9: #{tpu_custom_call.1} parent=1 // pred_fallthru
      _
    // Predicated region
    $region10: #{tpu_custom_call.1} parent=1 // pred_check
      _
    $region11: #{tpu_custom_call.1} parent=1 // pred_check_branch
      %31 = sbr.rel (0) target = $region13
    $region12: #{tpu_custom_call.1} parent=1 // pred_region
      %32 = dma.done [#allocation3], 128
    $region13: #{tpu_custom_call.1} parent=1 // pred_fallthru
      _
    // Predicated region
    $region14: #{tpu_custom_call.1} parent=1 // pred_check
      _
    $region15: #{tpu_custom_call.1} parent=1 // pred_check_branch
      %34 = sbr.rel (0) target = $region17
    $region16: #{tpu_custom_call.1} parent=1 // pred_region
      %35 = dma.done [#allocation6], 640
    $region17: #{tpu_custom_call.1} parent=1 // pred_fallthru
      _
    %v36 = vld [vmem:[#allocation2] sm:$0xff]
    %v37 = vld [vmem:[#allocation5] sm:$0xff]
    %v38 = vld [vmem:[#allocation5 + $0x8] sm:$0xff]
    %v39 = vld [vmem:[#allocation5 + $0x10] sm:$0xff]
    %v40 = vld [vmem:[#allocation5 + $0x18] sm:$0xff]
    %v41 = vld [vmem:[#allocation5 + $0x20] sm:$0xff]
    %43 = vset.pattern.permute.xlu0 0
    %44 = vperm.xlu0 %43, %v36
    %v45 = vpop.permute.xlu0 %44
    %v47 = vmul.f32 %v37, %v45
    %v48 = vmul.f32 %v38, %v45
    %v49 = vmul.f32 %v39, %v45
    %v50 = vmul.f32 %v40, %v45
    %v51 = vadd.f32 %v47, 0.0
    %v52 = vadd.f32 %v48, 0.0
    %v53 = vadd.f32 %v49, 0.0
    %v54 = vadd.f32 %v50, 0.0
    %55 = vset.pattern.permute.xlu0 1
    %56 = vperm.xlu0 %55, %v36
    %v57 = vpop.permute.xlu0 %56
    %v59 = vmul.f32 %v37, %v57
    %v60 = vmul.f32 %v38, %v57
    %v61 = vmul.f32 %v39, %v57
    %v62 = vmul.f32 %v40, %v57
    %v63 = vmul.f32 %v41, %v57
    %v64 = vadd.f32 %v59, 0.0
    %v65 = vadd.f32 %v60, 0.0
    %v66 = vadd.f32 %v61, 0.0
    %v67 = vadd.f32 %v62, 0.0
    %v68 = vadd.f32 %v63, 0.0
    %69 = vset.pattern.permute.xlu0 2
    %70 = vperm.xlu0 %69, %v36
    %v71 = vpop.permute.xlu0 %70
    %v73 = vmul.f32 %v37, %v71
    %v74 = vmul.f32 %v38, %v71
    %v75 = vmul.f32 %v39, %v71
    %v76 = vmul.f32 %v40, %v71
    %v77 = vmul.f32 %v41, %v71
    %83 = vrot.lane.b32.xlu0 %v73, 126
    %v84 = vpop.permute.xlu0 %83
    %85 = vrot.lane.b32.xlu0 %v74, 126
    %v86 = vpop.permute.xlu0 %85
    %87 = vrot.lane.b32.xlu0 %v75, 126
    %v88 = vpop.permute.xlu0 %87
    %89 = vrot.lane.b32.xlu0 %v76, 126
    %v90 = vpop.permute.xlu0 %89
    %91 = vrot.lane.b32.xlu0 %v77, 126
    %v92 = vpop.permute.xlu0 %91
    %vm93 = vcmask 1031168
    %v94 = vsel %vm93, %v84, %v86
    %v95 = vsel %vm93, %v86, %v88
    %v96 = vsel %vm93, %v88, %v90
    %v97 = vsel %vm93, %v90, %v92
    %v102 = vadd.f32 %v51, %v94
    %v103 = vadd.f32 %v52, %v95
    %v104 = vadd.f32 %v53, %v96
    %v105 = vadd.f32 %v54, %v97
    %106 = vset.pattern.permute.xlu0 3
    %107 = vperm.xlu0 %106, %v36
    %v108 = vpop.permute.xlu0 %107
    %v110 = vmul.f32 %v37, %v108
    %v111 = vmul.f32 %v38, %v108
    %v112 = vmul.f32 %v39, %v108
    %v113 = vmul.f32 %v40, %v108
    %v114 = vmul.f32 %v41, %v108
    %120 = vrot.lane.b32.xlu0 %v110, 126
    %v121 = vpop.permute.xlu0 %120
    %122 = vrot.lane.b32.xlu0 %v111, 126
    %v123 = vpop.permute.xlu0 %122
    %124 = vrot.lane.b32.xlu0 %v112, 126
    %v125 = vpop.permute.xlu0 %124
    %126 = vrot.lane.b32.xlu0 %v113, 126
    %v127 = vpop.permute.xlu0 %126
    %128 = vrot.lane.b32.xlu0 %v114, 126
    %v129 = vpop.permute.xlu0 %128
    %v130 = vsel %vm93, %v121, %v123
    %v131 = vsel %vm93, %v123, %v125
    %v132 = vsel %vm93, %v125, %v127
    %v133 = vsel %vm93, %v127, %v129
    %v139 = vadd.f32 %v64, %v130
    %v140 = vadd.f32 %v65, %v131
    %v141 = vadd.f32 %v66, %v132
    %v142 = vadd.f32 %v67, %v133
    %v143 = vadd.f32 %v68, %v129
    %144 = vset.pattern.permute.xlu0 4
    %145 = vperm.xlu0 %144, %v36
    %v146 = vpop.permute.xlu0 %145
    %v148 = vmul.f32 %v37, %v146
    %v149 = vmul.f32 %v38, %v146
    %v150 = vmul.f32 %v39, %v146
    %v151 = vmul.f32 %v40, %v146
    %v152 = vmul.f32 %v41, %v146
    %158 = vrot.lane.b32.xlu0 %v148, 124
    %v159 = vpop.permute.xlu0 %158
    %160 = vrot.lane.b32.xlu0 %v149, 124
    %v161 = vpop.permute.xlu0 %160
    %162 = vrot.lane.b32.xlu0 %v150, 124
    %v163 = vpop.permute.xlu0 %162
    %164 = vrot.lane.b32.xlu0 %v151, 124
    %v165 = vpop.permute.xlu0 %164
    %166 = vrot.lane.b32.xlu0 %v152, 124
    %v167 = vpop.permute.xlu0 %166
    %vm168 = vcmask 1014784
    %v169 = vsel %vm168, %v159, %v161
    %v170 = vsel %vm168, %v161, %v163
    %v171 = vsel %vm168, %v163, %v165
    %v172 = vsel %vm168, %v165, %v167
    %v177 = vadd.f32 %v102, %v169
    %v178 = vadd.f32 %v103, %v170
    %v179 = vadd.f32 %v104, %v171
    %v180 = vadd.f32 %v105, %v172
    %181 = vset.pattern.permute.xlu0 5
    %182 = vperm.xlu0 %181, %v36
    %v183 = vpop.permute.xlu0 %182
    %v185 = vmul.f32 %v37, %v183
    %v186 = vmul.f32 %v38, %v183
    %v187 = vmul.f32 %v39, %v183
    %v188 = vmul.f32 %v40, %v183
    %v189 = vmul.f32 %v41, %v183
    %195 = vrot.lane.b32.xlu0 %v185, 124
    %v196 = vpop.permute.xlu0 %195
    %197 = vrot.lane.b32.xlu0 %v186, 124
    %v198 = vpop.permute.xlu0 %197
    %199 = vrot.lane.b32.xlu0 %v187, 124
    %v200 = vpop.permute.xlu0 %199
    %201 = vrot.lane.b32.xlu0 %v188, 124
    %v202 = vpop.permute.xlu0 %201
    %203 = vrot.lane.b32.xlu0 %v189, 124
    %v204 = vpop.permute.xlu0 %203
    %v205 = vsel %vm168, %v196, %v198
    %v206 = vsel %vm168, %v198, %v200
    %v207 = vsel %vm168, %v200, %v202
    %v208 = vsel %vm168, %v202, %v204
    %v214 = vadd.f32 %v139, %v205
    %v215 = vadd.f32 %v140, %v206
    %v216 = vadd.f32 %v141, %v207
    %v217 = vadd.f32 %v142, %v208
    %v218 = vadd.f32 %v143, %v204
    %219 = vset.pattern.permute.xlu0 6
    %220 = vperm.xlu0 %219, %v36
    %v221 = vpop.permute.xlu0 %220
    %v223 = vmul.f32 %v37, %v221
    %v224 = vmul.f32 %v38, %v221
    %v225 = vmul.f32 %v39, %v221
    %v226 = vmul.f32 %v40, %v221
    %v227 = vmul.f32 %v41, %v221
    %233 = vrot.lane.b32.xlu0 %v223, 122
    %v234 = vpop.permute.xlu0 %233
    %235 = vrot.lane.b32.xlu0 %v224, 122
    %v236 = vpop.permute.xlu0 %235
    %237 = vrot.lane.b32.xlu0 %v225, 122
    %v238 = vpop.permute.xlu0 %237
    %239 = vrot.lane.b32.xlu0 %v226, 122
    %v240 = vpop.permute.xlu0 %239
    %241 = vrot.lane.b32.xlu0 %v227, 122
    %v242 = vpop.permute.xlu0 %241
    %vm243 = vcmask 998400
    %v244 = vsel %vm243, %v234, %v236
    %v245 = vsel %vm243, %v236, %v238
    %v246 = vsel %vm243, %v238, %v240
    %v247 = vsel %vm243, %v240, %v242
    %v252 = vadd.f32 %v177, %v244
    %v253 = vadd.f32 %v178, %v245
    %v254 = vadd.f32 %v179, %v246
    %v255 = vadd.f32 %v180, %v247
    %256 = vset.pattern.permute.xlu0 7
    %257 = vperm.xlu0 %256, %v36
    %v258 = vpop.permute.xlu0 %257
    %v260 = vmul.f32 %v37, %v258
    %v261 = vmul.f32 %v38, %v258
    %v262 = vmul.f32 %v39, %v258
    %v263 = vmul.f32 %v40, %v258
    %v264 = vmul.f32 %v41, %v258
    %270 = vrot.lane.b32.xlu0 %v260, 122
    %v271 = vpop.permute.xlu0 %270
    %272 = vrot.lane.b32.xlu0 %v261, 122
    %v273 = vpop.permute.xlu0 %272
    %274 = vrot.lane.b32.xlu0 %v262, 122
    %v275 = vpop.permute.xlu0 %274
    %276 = vrot.lane.b32.xlu0 %v263, 122
    %v277 = vpop.permute.xlu0 %276
    %278 = vrot.lane.b32.xlu0 %v264, 122
    %v279 = vpop.permute.xlu0 %278
    %v280 = vsel %vm243, %v271, %v273
    %v281 = vsel %vm243, %v273, %v275
    %v282 = vsel %vm243, %v275, %v277
    %v283 = vsel %vm243, %v277, %v279
    %v289 = vadd.f32 %v214, %v280
    %v290 = vadd.f32 %v215, %v281
    %v291 = vadd.f32 %v216, %v282
    %v292 = vadd.f32 %v217, %v283
    %v293 = vadd.f32 %v218, %v279
    %294 = vset.pattern.permute.xlu0 8
    %295 = vperm.xlu0 %294, %v36
    %v296 = vpop.permute.xlu0 %295
    %v298 = vmul.f32 %v37, %v296
    %v299 = vmul.f32 %v38, %v296
    %v300 = vmul.f32 %v39, %v296
    %v301 = vmul.f32 %v40, %v296
    %v302 = vmul.f32 %v41, %v296
    %308 = vrot.lane.b32.xlu0 %v298, 120
    %v309 = vpop.permute.xlu0 %308
    %310 = vrot.lane.b32.xlu0 %v299, 120
    %v311 = vpop.permute.xlu0 %310
    %312 = vrot.lane.b32.xlu0 %v300, 120
    %v313 = vpop.permute.xlu0 %312
    %314 = vrot.lane.b32.xlu0 %v301, 120
    %v315 = vpop.permute.xlu0 %314
    %316 = vrot.lane.b32.xlu0 %v302, 120
    %v317 = vpop.permute.xlu0 %316
    %vm318 = vcmask 982016
    %v319 = vsel %vm318, %v309, %v311
    %v320 = vsel %vm318, %v311, %v313
    %v321 = vsel %vm318, %v313, %v315
    %v322 = vsel %vm318, %v315, %v317
    %v327 = vadd.f32 %v252, %v319
    %v328 = vadd.f32 %v253, %v320
    %v329 = vadd.f32 %v254, %v321
    %v330 = vadd.f32 %v255, %v322
    %331 = vset.pattern.permute.xlu0 9
    %332 = vperm.xlu0 %331, %v36
    %v333 = vpop.permute.xlu0 %332
    %v335 = vmul.f32 %v37, %v333
    %v336 = vmul.f32 %v38, %v333
    %v337 = vmul.f32 %v39, %v333
    %v338 = vmul.f32 %v40, %v333
    %v339 = vmul.f32 %v41, %v333
    %345 = vrot.lane.b32.xlu0 %v335, 120
    %v346 = vpop.permute.xlu0 %345
    %347 = vrot.lane.b32.xlu0 %v336, 120
    %v348 = vpop.permute.xlu0 %347
    %349 = vrot.lane.b32.xlu0 %v337, 120
    %v350 = vpop.permute.xlu0 %349
    %351 = vrot.lane.b32.xlu0 %v338, 120
    %v352 = vpop.permute.xlu0 %351
    %353 = vrot.lane.b32.xlu0 %v339, 120
    %v354 = vpop.permute.xlu0 %353
    %v355 = vsel %vm318, %v346, %v348
    %v356 = vsel %vm318, %v348, %v350
    %v357 = vsel %vm318, %v350, %v352
    %v358 = vsel %vm318, %v352, %v354
    %v364 = vadd.f32 %v289, %v355
    %v365 = vadd.f32 %v290, %v356
    %v366 = vadd.f32 %v291, %v357
    %v367 = vadd.f32 %v292, %v358
    %v368 = vadd.f32 %v293, %v354
    %369 = vset.pattern.permute.xlu0 10
    %370 = vperm.xlu0 %369, %v36
    %v371 = vpop.permute.xlu0 %370
    %v373 = vmul.f32 %v37, %v371
    %v374 = vmul.f32 %v38, %v371
    %v375 = vmul.f32 %v39, %v371
    %v376 = vmul.f32 %v40, %v371
    %v377 = vmul.f32 %v41, %v371
    %383 = vrot.lane.b32.xlu0 %v373, 118
    %v384 = vpop.permute.xlu0 %383
    %385 = vrot.lane.b32.xlu0 %v374, 118
    %v386 = vpop.permute.xlu0 %385
    %387 = vrot.lane.b32.xlu0 %v375, 118
    %v388 = vpop.permute.xlu0 %387
    %389 = vrot.lane.b32.xlu0 %v376, 118
    %v390 = vpop.permute.xlu0 %389
    %391 = vrot.lane.b32.xlu0 %v377, 118
    %v392 = vpop.permute.xlu0 %391
    %vm393 = vcmask 965632
    %v394 = vsel %vm393, %v384, %v386
    %v395 = vsel %vm393, %v386, %v388
    %v396 = vsel %vm393, %v388, %v390
    %v397 = vsel %vm393, %v390, %v392
    %v402 = vadd.f32 %v327, %v394
    %v403 = vadd.f32 %v328, %v395
    %v404 = vadd.f32 %v329, %v396
    %v405 = vadd.f32 %v330, %v397
    %406 = vset.pattern.permute.xlu0 11
    %407 = vperm.xlu0 %406, %v36
    %v408 = vpop.permute.xlu0 %407
    %v410 = vmul.f32 %v37, %v408
    %v411 = vmul.f32 %v38, %v408
    %v412 = vmul.f32 %v39, %v408
    %v413 = vmul.f32 %v40, %v408
    %v414 = vmul.f32 %v41, %v408
    %420 = vrot.lane.b32.xlu0 %v410, 118
    %v421 = vpop.permute.xlu0 %420
    %422 = vrot.lane.b32.xlu0 %v411, 118
    %v423 = vpop.permute.xlu0 %422
    %424 = vrot.lane.b32.xlu0 %v412, 118
    %v425 = vpop.permute.xlu0 %424
    %426 = vrot.lane.b32.xlu0 %v413, 118
    %v427 = vpop.permute.xlu0 %426
    %428 = vrot.lane.b32.xlu0 %v414, 118
    %v429 = vpop.permute.xlu0 %428
    %v430 = vsel %vm393, %v421, %v423
    %v431 = vsel %vm393, %v423, %v425
    %v432 = vsel %vm393, %v425, %v427
    %v433 = vsel %vm393, %v427, %v429
    %v439 = vadd.f32 %v364, %v430
    %v440 = vadd.f32 %v365, %v431
    %v441 = vadd.f32 %v366, %v432
    %v442 = vadd.f32 %v367, %v433
    %v443 = vadd.f32 %v368, %v429
    %444 = vset.pattern.permute.xlu0 12
    %445 = vperm.xlu0 %444, %v36
    %v446 = vpop.permute.xlu0 %445
    %v448 = vmul.f32 %v37, %v446
    %v449 = vmul.f32 %v38, %v446
    %v450 = vmul.f32 %v39, %v446
    %v451 = vmul.f32 %v40, %v446
    %v452 = vmul.f32 %v41, %v446
    %458 = vrot.lane.b32.xlu0 %v448, 116
    %v459 = vpop.permute.xlu0 %458
    %460 = vrot.lane.b32.xlu0 %v449, 116
    %v461 = vpop.permute.xlu0 %460
    %462 = vrot.lane.b32.xlu0 %v450, 116
    %v463 = vpop.permute.xlu0 %462
    %464 = vrot.lane.b32.xlu0 %v451, 116
    %v465 = vpop.permute.xlu0 %464
    %466 = vrot.lane.b32.xlu0 %v452, 116
    %v467 = vpop.permute.xlu0 %466
    %vm468 = vcmask 949248
    %v469 = vsel %vm468, %v459, %v461
    %v470 = vsel %vm468, %v461, %v463
    %v471 = vsel %vm468, %v463, %v465
    %v472 = vsel %vm468, %v465, %v467
    %v477 = vadd.f32 %v402, %v469
    %v478 = vadd.f32 %v403, %v470
    %v479 = vadd.f32 %v404, %v471
    %v480 = vadd.f32 %v405, %v472
    %481 = vset.pattern.permute.xlu0 13
    %482 = vperm.xlu0 %481, %v36
    %v483 = vpop.permute.xlu0 %482
    %v485 = vmul.f32 %v37, %v483
    %v486 = vmul.f32 %v38, %v483
    %v487 = vmul.f32 %v39, %v483
    %v488 = vmul.f32 %v40, %v483
    %v489 = vmul.f32 %v41, %v483
    %495 = vrot.lane.b32.xlu0 %v485, 116
    %v496 = vpop.permute.xlu0 %495
    %497 = vrot.lane.b32.xlu0 %v486, 116
    %v498 = vpop.permute.xlu0 %497
    %499 = vrot.lane.b32.xlu0 %v487, 116
    %v500 = vpop.permute.xlu0 %499
    %501 = vrot.lane.b32.xlu0 %v488, 116
    %v502 = vpop.permute.xlu0 %501
    %503 = vrot.lane.b32.xlu0 %v489, 116
    %v504 = vpop.permute.xlu0 %503
    %v505 = vsel %vm468, %v496, %v498
    %v506 = vsel %vm468, %v498, %v500
    %v507 = vsel %vm468, %v500, %v502
    %v508 = vsel %vm468, %v502, %v504
    %v514 = vadd.f32 %v439, %v505
    %v515 = vadd.f32 %v440, %v506
    %v516 = vadd.f32 %v441, %v507
    %v517 = vadd.f32 %v442, %v508
    %v518 = vadd.f32 %v443, %v504
    %519 = vset.pattern.permute.xlu0 14
    %520 = vperm.xlu0 %519, %v36
    %v521 = vpop.permute.xlu0 %520
    %v523 = vmul.f32 %v37, %v521
    %v524 = vmul.f32 %v38, %v521
    %v525 = vmul.f32 %v39, %v521
    %v526 = vmul.f32 %v40, %v521
    %v527 = vmul.f32 %v41, %v521
    %533 = vrot.lane.b32.xlu0 %v523, 114
    %v534 = vpop.permute.xlu0 %533
    %535 = vrot.lane.b32.xlu0 %v524, 114
    %v536 = vpop.permute.xlu0 %535
    %537 = vrot.lane.b32.xlu0 %v525, 114
    %v538 = vpop.permute.xlu0 %537
    %539 = vrot.lane.b32.xlu0 %v526, 114
    %v540 = vpop.permute.xlu0 %539
    %541 = vrot.lane.b32.xlu0 %v527, 114
    %v542 = vpop.permute.xlu0 %541
    %vm543 = vcmask 932864
    %v544 = vsel %vm543, %v534, %v536
    %v545 = vsel %vm543, %v536, %v538
    %v546 = vsel %vm543, %v538, %v540
    %v547 = vsel %vm543, %v540, %v542
    %v552 = vadd.f32 %v477, %v544
    %v553 = vadd.f32 %v478, %v545
    %v554 = vadd.f32 %v479, %v546
    %v555 = vadd.f32 %v480, %v547
    %556 = vset.pattern.permute.xlu0 15
    %557 = vperm.xlu0 %556, %v36
    %v558 = vpop.permute.xlu0 %557
    %v560 = vmul.f32 %v37, %v558
    %v561 = vmul.f32 %v38, %v558
    %v562 = vmul.f32 %v39, %v558
    %v563 = vmul.f32 %v40, %v558
    %v564 = vmul.f32 %v41, %v558
    %570 = vrot.lane.b32.xlu0 %v560, 114
    %v571 = vpop.permute.xlu0 %570
    %572 = vrot.lane.b32.xlu0 %v561, 114
    %v573 = vpop.permute.xlu0 %572
    %574 = vrot.lane.b32.xlu0 %v562, 114
    %v575 = vpop.permute.xlu0 %574
    %576 = vrot.lane.b32.xlu0 %v563, 114
    %v577 = vpop.permute.xlu0 %576
    %578 = vrot.lane.b32.xlu0 %v564, 114
    %v579 = vpop.permute.xlu0 %578
    %v580 = vsel %vm543, %v571, %v573
    %v581 = vsel %vm543, %v573, %v575
    %v582 = vsel %vm543, %v575, %v577
    %v583 = vsel %vm543, %v577, %v579
    %v589 = vadd.f32 %v514, %v580
    %v590 = vadd.f32 %v515, %v581
    %v591 = vadd.f32 %v516, %v582
    %v592 = vadd.f32 %v517, %v583
    %v593 = vadd.f32 %v518, %v579
    %594 = vset.pattern.permute.xlu0 16
    %595 = vperm.xlu0 %594, %v36
    %v596 = vpop.permute.xlu0 %595
    %v598 = vmul.f32 %v37, %v596
    %v599 = vmul.f32 %v38, %v596
    %v600 = vmul.f32 %v39, %v596
    %v601 = vmul.f32 %v40, %v596
    %v602 = vmul.f32 %v41, %v596
    %608 = vrot.lane.b32.xlu0 %v598, 112
    %v609 = vpop.permute.xlu0 %608
    %610 = vrot.lane.b32.xlu0 %v599, 112
    %v611 = vpop.permute.xlu0 %610
    %612 = vrot.lane.b32.xlu0 %v600, 112
    %v613 = vpop.permute.xlu0 %612
    %614 = vrot.lane.b32.xlu0 %v601, 112
    %v615 = vpop.permute.xlu0 %614
    %616 = vrot.lane.b32.xlu0 %v602, 112
    %v617 = vpop.permute.xlu0 %616
    %vm618 = vcmask 916480
    %v619 = vsel %vm618, %v609, %v611
    %v620 = vsel %vm618, %v611, %v613
    %v621 = vsel %vm618, %v613, %v615
    %v622 = vsel %vm618, %v615, %v617
    %v627 = vadd.f32 %v552, %v619
    %v628 = vadd.f32 %v553, %v620
    %v629 = vadd.f32 %v554, %v621
    %v630 = vadd.f32 %v555, %v622
    %631 = vset.pattern.permute.xlu0 17
    %632 = vperm.xlu0 %631, %v36
    %v633 = vpop.permute.xlu0 %632
    %v635 = vmul.f32 %v37, %v633
    %v636 = vmul.f32 %v38, %v633
    %v637 = vmul.f32 %v39, %v633
    %v638 = vmul.f32 %v40, %v633
    %v639 = vmul.f32 %v41, %v633
    %645 = vrot.lane.b32.xlu0 %v635, 112
    %v646 = vpop.permute.xlu0 %645
    %647 = vrot.lane.b32.xlu0 %v636, 112
    %v648 = vpop.permute.xlu0 %647
    %649 = vrot.lane.b32.xlu0 %v637, 112
    %v650 = vpop.permute.xlu0 %649
    %651 = vrot.lane.b32.xlu0 %v638, 112
    %v652 = vpop.permute.xlu0 %651
    %653 = vrot.lane.b32.xlu0 %v639, 112
    %v654 = vpop.permute.xlu0 %653
    %v655 = vsel %vm618, %v646, %v648
    %v656 = vsel %vm618, %v648, %v650
    %v657 = vsel %vm618, %v650, %v652
    %v658 = vsel %vm618, %v652, %v654
    %v664 = vadd.f32 %v589, %v655
    %v665 = vadd.f32 %v590, %v656
    %v666 = vadd.f32 %v591, %v657
    %v667 = vadd.f32 %v592, %v658
    %v668 = vadd.f32 %v593, %v654
    %669 = vset.pattern.permute.xlu0 18
    %670 = vperm.xlu0 %669, %v36
    %v671 = vpop.permute.xlu0 %670
    %v673 = vmul.f32 %v37, %v671
    %v674 = vmul.f32 %v38, %v671
    %v675 = vmul.f32 %v39, %v671
    %v676 = vmul.f32 %v40, %v671
    %v677 = vmul.f32 %v41, %v671
    %683 = vrot.lane.b32.xlu0 %v673, 110
    %v684 = vpop.permute.xlu0 %683
    %685 = vrot.lane.b32.xlu0 %v674, 110
    %v686 = vpop.permute.xlu0 %685
    %687 = vrot.lane.b32.xlu0 %v675, 110
    %v688 = vpop.permute.xlu0 %687
    %689 = vrot.lane.b32.xlu0 %v676, 110
    %v690 = vpop.permute.xlu0 %689
    %691 = vrot.lane.b32.xlu0 %v677, 110
    %v692 = vpop.permute.xlu0 %691
    %vm693 = vcmask 900096
    %v694 = vsel %vm693, %v684, %v686
    %v695 = vsel %vm693, %v686, %v688
    %v696 = vsel %vm693, %v688, %v690
    %v697 = vsel %vm693, %v690, %v692
    %v702 = vadd.f32 %v627, %v694
    %v703 = vadd.f32 %v628, %v695
    %v704 = vadd.f32 %v629, %v696
    %v705 = vadd.f32 %v630, %v697
    %706 = vset.pattern.permute.xlu0 19
    %707 = vperm.xlu0 %706, %v36
    %v708 = vpop.permute.xlu0 %707
    %v710 = vmul.f32 %v37, %v708
    %v711 = vmul.f32 %v38, %v708
    %v712 = vmul.f32 %v39, %v708
    %v713 = vmul.f32 %v40, %v708
    %v714 = vmul.f32 %v41, %v708
    %720 = vrot.lane.b32.xlu0 %v710, 110
    %v721 = vpop.permute.xlu0 %720
    %722 = vrot.lane.b32.xlu0 %v711, 110
    %v723 = vpop.permute.xlu0 %722
    %724 = vrot.lane.b32.xlu0 %v712, 110
    %v725 = vpop.permute.xlu0 %724
    %726 = vrot.lane.b32.xlu0 %v713, 110
    %v727 = vpop.permute.xlu0 %726
    %728 = vrot.lane.b32.xlu0 %v714, 110
    %v729 = vpop.permute.xlu0 %728
    %v730 = vsel %vm693, %v721, %v723
    %v731 = vsel %vm693, %v723, %v725
    %v732 = vsel %vm693, %v725, %v727
    %v733 = vsel %vm693, %v727, %v729
    %v739 = vadd.f32 %v664, %v730
    %v740 = vadd.f32 %v665, %v731
    %v741 = vadd.f32 %v666, %v732
    %v742 = vadd.f32 %v667, %v733
    %v743 = vadd.f32 %v668, %v729
    %744 = vset.pattern.permute.xlu0 20
    %745 = vperm.xlu0 %744, %v36
    %v746 = vpop.permute.xlu0 %745
    %v748 = vmul.f32 %v37, %v746
    %v749 = vmul.f32 %v38, %v746
    %v750 = vmul.f32 %v39, %v746
    %v751 = vmul.f32 %v40, %v746
    %v752 = vmul.f32 %v41, %v746
    %758 = vrot.lane.b32.xlu0 %v748, 108
    %v759 = vpop.permute.xlu0 %758
    %760 = vrot.lane.b32.xlu0 %v749, 108
    %v761 = vpop.permute.xlu0 %760
    %762 = vrot.lane.b32.xlu0 %v750, 108
    %v763 = vpop.permute.xlu0 %762
    %764 = vrot.lane.b32.xlu0 %v751, 108
    %v765 = vpop.permute.xlu0 %764
    %766 = vrot.lane.b32.xlu0 %v752, 108
    %v767 = vpop.permute.xlu0 %766
    %vm768 = vcmask 883712
    %v769 = vsel %vm768, %v759, %v761
    %v770 = vsel %vm768, %v761, %v763
    %v771 = vsel %vm768, %v763, %v765
    %v772 = vsel %vm768, %v765, %v767
    %v777 = vadd.f32 %v702, %v769
    %v778 = vadd.f32 %v703, %v770
    %v779 = vadd.f32 %v704, %v771
    %v780 = vadd.f32 %v705, %v772
    %781 = vset.pattern.permute.xlu0 21
    %782 = vperm.xlu0 %781, %v36
    %v783 = vpop.permute.xlu0 %782
    %v785 = vmul.f32 %v37, %v783
    %v786 = vmul.f32 %v38, %v783
    %v787 = vmul.f32 %v39, %v783
    %v788 = vmul.f32 %v40, %v783
    %v789 = vmul.f32 %v41, %v783
    %795 = vrot.lane.b32.xlu0 %v785, 108
    %v796 = vpop.permute.xlu0 %795
    %797 = vrot.lane.b32.xlu0 %v786, 108
    %v798 = vpop.permute.xlu0 %797
    %799 = vrot.lane.b32.xlu0 %v787, 108
    %v800 = vpop.permute.xlu0 %799
    %801 = vrot.lane.b32.xlu0 %v788, 108
    %v802 = vpop.permute.xlu0 %801
    %803 = vrot.lane.b32.xlu0 %v789, 108
    %v804 = vpop.permute.xlu0 %803
    %v805 = vsel %vm768, %v796, %v798
    %v806 = vsel %vm768, %v798, %v800
    %v807 = vsel %vm768, %v800, %v802
    %v808 = vsel %vm768, %v802, %v804
    %v814 = vadd.f32 %v739, %v805
    %v815 = vadd.f32 %v740, %v806
    %v816 = vadd.f32 %v741, %v807
    %v817 = vadd.f32 %v742, %v808
    %v818 = vadd.f32 %v743, %v804
    %819 = vset.pattern.permute.xlu0 22
    %820 = vperm.xlu0 %819, %v36
    %v821 = vpop.permute.xlu0 %820
    %v823 = vmul.f32 %v37, %v821
    %v824 = vmul.f32 %v38, %v821
    %v825 = vmul.f32 %v39, %v821
    %v826 = vmul.f32 %v40, %v821
    %v827 = vmul.f32 %v41, %v821
    %833 = vrot.lane.b32.xlu0 %v823, 106
    %v834 = vpop.permute.xlu0 %833
    %835 = vrot.lane.b32.xlu0 %v824, 106
    %v836 = vpop.permute.xlu0 %835
    %837 = vrot.lane.b32.xlu0 %v825, 106
    %v838 = vpop.permute.xlu0 %837
    %839 = vrot.lane.b32.xlu0 %v826, 106
    %v840 = vpop.permute.xlu0 %839
    %841 = vrot.lane.b32.xlu0 %v827, 106
    %v842 = vpop.permute.xlu0 %841
    %vm843 = vcmask 867328
    %v844 = vsel %vm843, %v834, %v836
    %v845 = vsel %vm843, %v836, %v838
    %v846 = vsel %vm843, %v838, %v840
    %v847 = vsel %vm843, %v840, %v842
    %v852 = vadd.f32 %v777, %v844
    %v853 = vadd.f32 %v778, %v845
    %v854 = vadd.f32 %v779, %v846
    %v855 = vadd.f32 %v780, %v847
    %856 = vset.pattern.permute.xlu0 23
    %857 = vperm.xlu0 %856, %v36
    %v858 = vpop.permute.xlu0 %857
    %v860 = vmul.f32 %v37, %v858
    %v861 = vmul.f32 %v38, %v858
    %v862 = vmul.f32 %v39, %v858
    %v863 = vmul.f32 %v40, %v858
    %v864 = vmul.f32 %v41, %v858
    %870 = vrot.lane.b32.xlu0 %v860, 106
    %v871 = vpop.permute.xlu0 %870
    %872 = vrot.lane.b32.xlu0 %v861, 106
    %v873 = vpop.permute.xlu0 %872
    %874 = vrot.lane.b32.xlu0 %v862, 106
    %v875 = vpop.permute.xlu0 %874
    %876 = vrot.lane.b32.xlu0 %v863, 106
    %v877 = vpop.permute.xlu0 %876
    %878 = vrot.lane.b32.xlu0 %v864, 106
    %v879 = vpop.permute.xlu0 %878
    %v880 = vsel %vm843, %v871, %v873
    %v881 = vsel %vm843, %v873, %v875
    %v882 = vsel %vm843, %v875, %v877
    %v883 = vsel %vm843, %v877, %v879
    %v889 = vadd.f32 %v814, %v880
    %v890 = vadd.f32 %v815, %v881
    %v891 = vadd.f32 %v816, %v882
    %v892 = vadd.f32 %v817, %v883
    %v893 = vadd.f32 %v818, %v879
    %894 = vset.pattern.permute.xlu0 24
    %895 = vperm.xlu0 %894, %v36
    %v896 = vpop.permute.xlu0 %895
    %v898 = vmul.f32 %v37, %v896
    %v899 = vmul.f32 %v38, %v896
    %v900 = vmul.f32 %v39, %v896
    %v901 = vmul.f32 %v40, %v896
    %v902 = vmul.f32 %v41, %v896
    %908 = vrot.lane.b32.xlu0 %v898, 104
    %v909 = vpop.permute.xlu0 %908
    %910 = vrot.lane.b32.xlu0 %v899, 104
    %v911 = vpop.permute.xlu0 %910
    %912 = vrot.lane.b32.xlu0 %v900, 104
    %v913 = vpop.permute.xlu0 %912
    %914 = vrot.lane.b32.xlu0 %v901, 104
    %v915 = vpop.permute.xlu0 %914
    %916 = vrot.lane.b32.xlu0 %v902, 104
    %v917 = vpop.permute.xlu0 %916
    %vm918 = vcmask 850944
    %v919 = vsel %vm918, %v909, %v911
    %v920 = vsel %vm918, %v911, %v913
    %v921 = vsel %vm918, %v913, %v915
    %v922 = vsel %vm918, %v915, %v917
    %v927 = vadd.f32 %v852, %v919
    %v928 = vadd.f32 %v853, %v920
    %v929 = vadd.f32 %v854, %v921
    %v930 = vadd.f32 %v855, %v922
    %931 = vset.pattern.permute.xlu0 25
    %932 = vperm.xlu0 %931, %v36
    %v933 = vpop.permute.xlu0 %932
    %v935 = vmul.f32 %v37, %v933
    %v936 = vmul.f32 %v38, %v933
    %v937 = vmul.f32 %v39, %v933
    %v938 = vmul.f32 %v40, %v933
    %v939 = vmul.f32 %v41, %v933
    %945 = vrot.lane.b32.xlu0 %v935, 104
    %v946 = vpop.permute.xlu0 %945
    %947 = vrot.lane.b32.xlu0 %v936, 104
    %v948 = vpop.permute.xlu0 %947
    %949 = vrot.lane.b32.xlu0 %v937, 104
    %v950 = vpop.permute.xlu0 %949
    %951 = vrot.lane.b32.xlu0 %v938, 104
    %v952 = vpop.permute.xlu0 %951
    %953 = vrot.lane.b32.xlu0 %v939, 104
    %v954 = vpop.permute.xlu0 %953
    %v955 = vsel %vm918, %v946, %v948
    %v956 = vsel %vm918, %v948, %v950
    %v957 = vsel %vm918, %v950, %v952
    %v958 = vsel %vm918, %v952, %v954
    %v964 = vadd.f32 %v889, %v955
    %v965 = vadd.f32 %v890, %v956
    %v966 = vadd.f32 %v891, %v957
    %v967 = vadd.f32 %v892, %v958
    %v968 = vadd.f32 %v893, %v954
    %969 = vset.pattern.permute.xlu0 26
    %970 = vperm.xlu0 %969, %v36
    %v971 = vpop.permute.xlu0 %970
    %v973 = vmul.f32 %v37, %v971
    %v974 = vmul.f32 %v38, %v971
    %v975 = vmul.f32 %v39, %v971
    %v976 = vmul.f32 %v40, %v971
    %v977 = vmul.f32 %v41, %v971
    %983 = vrot.lane.b32.xlu0 %v973, 102
    %v984 = vpop.permute.xlu0 %983
    %985 = vrot.lane.b32.xlu0 %v974, 102
    %v986 = vpop.permute.xlu0 %985
    %987 = vrot.lane.b32.xlu0 %v975, 102
    %v988 = vpop.permute.xlu0 %987
    %989 = vrot.lane.b32.xlu0 %v976, 102
    %v990 = vpop.permute.xlu0 %989
    %991 = vrot.lane.b32.xlu0 %v977, 102
    %v992 = vpop.permute.xlu0 %991
    %vm993 = vcmask 834560
    %v994 = vsel %vm993, %v984, %v986
    %v995 = vsel %vm993, %v986, %v988
    %v996 = vsel %vm993, %v988, %v990
    %v997 = vsel %vm993, %v990, %v992
    %v1002 = vadd.f32 %v927, %v994
    %v1003 = vadd.f32 %v928, %v995
    %v1004 = vadd.f32 %v929, %v996
    %v1005 = vadd.f32 %v930, %v997
    %1006 = vset.pattern.permute.xlu0 27
    %1007 = vperm.xlu0 %1006, %v36
    %v1008 = vpop.permute.xlu0 %1007
    %v1010 = vmul.f32 %v37, %v1008
    %v1011 = vmul.f32 %v38, %v1008
    %v1012 = vmul.f32 %v39, %v1008
    %v1013 = vmul.f32 %v40, %v1008
    %v1014 = vmul.f32 %v41, %v1008
    %1020 = vrot.lane.b32.xlu0 %v1010, 102
    %v1021 = vpop.permute.xlu0 %1020
    %1022 = vrot.lane.b32.xlu0 %v1011, 102
    %v1023 = vpop.permute.xlu0 %1022
    %1024 = vrot.lane.b32.xlu0 %v1012, 102
    %v1025 = vpop.permute.xlu0 %1024
    %1026 = vrot.lane.b32.xlu0 %v1013, 102
    %v1027 = vpop.permute.xlu0 %1026
    %1028 = vrot.lane.b32.xlu0 %v1014, 102
    %v1029 = vpop.permute.xlu0 %1028
    %v1030 = vsel %vm993, %v1021, %v1023
    %v1031 = vsel %vm993, %v1023, %v1025
    %v1032 = vsel %vm993, %v1025, %v1027
    %v1033 = vsel %vm993, %v1027, %v1029
    %v1039 = vadd.f32 %v964, %v1030
    %v1040 = vadd.f32 %v965, %v1031
    %v1041 = vadd.f32 %v966, %v1032
    %v1042 = vadd.f32 %v967, %v1033
    %v1043 = vadd.f32 %v968, %v1029
    %1044 = vset.pattern.permute.xlu0 28
    %1045 = vperm.xlu0 %1044, %v36
    %v1046 = vpop.permute.xlu0 %1045
    %v1048 = vmul.f32 %v37, %v1046
    %v1049 = vmul.f32 %v38, %v1046
    %v1050 = vmul.f32 %v39, %v1046
    %v1051 = vmul.f32 %v40, %v1046
    %v1052 = vmul.f32 %v41, %v1046
    %1058 = vrot.lane.b32.xlu0 %v1048, 100
    %v1059 = vpop.permute.xlu0 %1058
    %1060 = vrot.lane.b32.xlu0 %v1049, 100
    %v1061 = vpop.permute.xlu0 %1060
    %1062 = vrot.lane.b32.xlu0 %v1050, 100
    %v1063 = vpop.permute.xlu0 %1062
    %1064 = vrot.lane.b32.xlu0 %v1051, 100
    %v1065 = vpop.permute.xlu0 %1064
    %1066 = vrot.lane.b32.xlu0 %v1052, 100
    %v1067 = vpop.permute.xlu0 %1066
    %vm1068 = vcmask 818176
    %v1069 = vsel %vm1068, %v1059, %v1061
    %v1070 = vsel %vm1068, %v1061, %v1063
    %v1071 = vsel %vm1068, %v1063, %v1065
    %v1072 = vsel %vm1068, %v1065, %v1067
    %v1077 = vadd.f32 %v1002, %v1069
    %v1078 = vadd.f32 %v1003, %v1070
    %v1079 = vadd.f32 %v1004, %v1071
    %v1080 = vadd.f32 %v1005, %v1072
    %1081 = vset.pattern.permute.xlu0 29
    %1082 = vperm.xlu0 %1081, %v36
    %v1083 = vpop.permute.xlu0 %1082
    %v1085 = vmul.f32 %v37, %v1083
    %v1086 = vmul.f32 %v38, %v1083
    %v1087 = vmul.f32 %v39, %v1083
    %v1088 = vmul.f32 %v40, %v1083
    %v1089 = vmul.f32 %v41, %v1083
    %1095 = vrot.lane.b32.xlu0 %v1085, 100
    %v1096 = vpop.permute.xlu0 %1095
    %1097 = vrot.lane.b32.xlu0 %v1086, 100
    %v1098 = vpop.permute.xlu0 %1097
    %1099 = vrot.lane.b32.xlu0 %v1087, 100
    %v1100 = vpop.permute.xlu0 %1099
    %1101 = vrot.lane.b32.xlu0 %v1088, 100
    %v1102 = vpop.permute.xlu0 %1101
    %1103 = vrot.lane.b32.xlu0 %v1089, 100
    %v1104 = vpop.permute.xlu0 %1103
    %v1105 = vsel %vm1068, %v1096, %v1098
    %v1106 = vsel %vm1068, %v1098, %v1100
    %v1107 = vsel %vm1068, %v1100, %v1102
    %v1108 = vsel %vm1068, %v1102, %v1104
    %v1114 = vadd.f32 %v1039, %v1105
    %v1115 = vadd.f32 %v1040, %v1106
    %v1116 = vadd.f32 %v1041, %v1107
    %v1117 = vadd.f32 %v1042, %v1108
    %v1118 = vadd.f32 %v1043, %v1104
    %1119 = vset.pattern.permute.xlu0 30
    %1120 = vperm.xlu0 %1119, %v36
    %v1121 = vpop.permute.xlu0 %1120
    %v1123 = vmul.f32 %v37, %v1121
    %v1124 = vmul.f32 %v38, %v1121
    %v1125 = vmul.f32 %v39, %v1121
    %v1126 = vmul.f32 %v40, %v1121
    %v1127 = vmul.f32 %v41, %v1121
    %1133 = vrot.lane.b32.xlu0 %v1123, 98
    %v1134 = vpop.permute.xlu0 %1133
    %1135 = vrot.lane.b32.xlu0 %v1124, 98
    %v1136 = vpop.permute.xlu0 %1135
    %1137 = vrot.lane.b32.xlu0 %v1125, 98
    %v1138 = vpop.permute.xlu0 %1137
    %1139 = vrot.lane.b32.xlu0 %v1126, 98
    %v1140 = vpop.permute.xlu0 %1139
    %1141 = vrot.lane.b32.xlu0 %v1127, 98
    %v1142 = vpop.permute.xlu0 %1141
    %vm1143 = vcmask 801792
    %v1144 = vsel %vm1143, %v1134, %v1136
    %v1145 = vsel %vm1143, %v1136, %v1138
    %v1146 = vsel %vm1143, %v1138, %v1140
    %v1147 = vsel %vm1143, %v1140, %v1142
    %v1152 = vadd.f32 %v1077, %v1144
    %v1153 = vadd.f32 %v1078, %v1145
    %v1154 = vadd.f32 %v1079, %v1146
    %v1155 = vadd.f32 %v1080, %v1147
    %1156 = vset.pattern.permute.xlu0 31
    %1157 = vperm.xlu0 %1156, %v36
    %v1158 = vpop.permute.xlu0 %1157
    %v1160 = vmul.f32 %v37, %v1158
    %v1161 = vmul.f32 %v38, %v1158
    %v1162 = vmul.f32 %v39, %v1158
    %v1163 = vmul.f32 %v40, %v1158
    %v1164 = vmul.f32 %v41, %v1158
    %1170 = vrot.lane.b32.xlu0 %v1160, 98
    %v1171 = vpop.permute.xlu0 %1170
    %1172 = vrot.lane.b32.xlu0 %v1161, 98
    %v1173 = vpop.permute.xlu0 %1172
    %1174 = vrot.lane.b32.xlu0 %v1162, 98
    %v1175 = vpop.permute.xlu0 %1174
    %1176 = vrot.lane.b32.xlu0 %v1163, 98
    %v1177 = vpop.permute.xlu0 %1176
    %1178 = vrot.lane.b32.xlu0 %v1164, 98
    %v1179 = vpop.permute.xlu0 %1178
    %v1180 = vsel %vm1143, %v1171, %v1173
    %v1181 = vsel %vm1143, %v1173, %v1175
    %v1182 = vsel %vm1143, %v1175, %v1177
    %v1183 = vsel %vm1143, %v1177, %v1179
    %v1189 = vadd.f32 %v1114, %v1180
    %v1190 = vadd.f32 %v1115, %v1181
    %v1191 = vadd.f32 %v1116, %v1182
    %v1192 = vadd.f32 %v1117, %v1183
    %v1193 = vadd.f32 %v1118, %v1179
    %1194 = vset.pattern.permute.xlu0 32
    %1195 = vperm.xlu0 %1194, %v36
    %v1196 = vpop.permute.xlu0 %1195
    %v1198 = vmul.f32 %v37, %v1196
    %v1199 = vmul.f32 %v38, %v1196
    %v1200 = vmul.f32 %v39, %v1196
    %v1201 = vmul.f32 %v40, %v1196
    %v1202 = vmul.f32 %v41, %v1196
    %1208 = vrot.lane.b32.xlu0 %v1198, 96
    %v1209 = vpop.permute.xlu0 %1208
    %1210 = vrot.lane.b32.xlu0 %v1199, 96
    %v1211 = vpop.permute.xlu0 %1210
    %1212 = vrot.lane.b32.xlu0 %v1200, 96
    %v1213 = vpop.permute.xlu0 %1212
    %1214 = vrot.lane.b32.xlu0 %v1201, 96
    %v1215 = vpop.permute.xlu0 %1214
    %1216 = vrot.lane.b32.xlu0 %v1202, 96
    %v1217 = vpop.permute.xlu0 %1216
    %vm1218 = vcmask 785408
    %v1219 = vsel %vm1218, %v1209, %v1211
    %v1220 = vsel %vm1218, %v1211, %v1213
    %v1221 = vsel %vm1218, %v1213, %v1215
    %v1222 = vsel %vm1218, %v1215, %v1217
    %v1227 = vadd.f32 %v1152, %v1219
    %v1228 = vadd.f32 %v1153, %v1220
    %v1229 = vadd.f32 %v1154, %v1221
    %v1230 = vadd.f32 %v1155, %v1222
    %1231 = vset.pattern.permute.xlu0 33
    %1232 = vperm.xlu0 %1231, %v36
    %v1233 = vpop.permute.xlu0 %1232
    %v1235 = vmul.f32 %v37, %v1233
    %v1236 = vmul.f32 %v38, %v1233
    %v1237 = vmul.f32 %v39, %v1233
    %v1238 = vmul.f32 %v40, %v1233
    %v1239 = vmul.f32 %v41, %v1233
    %1245 = vrot.lane.b32.xlu0 %v1235, 96
    %v1246 = vpop.permute.xlu0 %1245
    %1247 = vrot.lane.b32.xlu0 %v1236, 96
    %v1248 = vpop.permute.xlu0 %1247
    %1249 = vrot.lane.b32.xlu0 %v1237, 96
    %v1250 = vpop.permute.xlu0 %1249
    %1251 = vrot.lane.b32.xlu0 %v1238, 96
    %v1252 = vpop.permute.xlu0 %1251
    %1253 = vrot.lane.b32.xlu0 %v1239, 96
    %v1254 = vpop.permute.xlu0 %1253
    %v1255 = vsel %vm1218, %v1246, %v1248
    %v1256 = vsel %vm1218, %v1248, %v1250
    %v1257 = vsel %vm1218, %v1250, %v1252
    %v1258 = vsel %vm1218, %v1252, %v1254
    %v1264 = vadd.f32 %v1189, %v1255
    %v1265 = vadd.f32 %v1190, %v1256
    %v1266 = vadd.f32 %v1191, %v1257
    %v1267 = vadd.f32 %v1192, %v1258
    %v1268 = vadd.f32 %v1193, %v1254
    %1269 = vset.pattern.permute.xlu0 34
    %1270 = vperm.xlu0 %1269, %v36
    %v1271 = vpop.permute.xlu0 %1270
    %v1273 = vmul.f32 %v37, %v1271
    %v1274 = vmul.f32 %v38, %v1271
    %v1275 = vmul.f32 %v39, %v1271
    %v1276 = vmul.f32 %v40, %v1271
    %v1277 = vmul.f32 %v41, %v1271
    %1283 = vrot.lane.b32.xlu0 %v1273, 94
    %v1284 = vpop.permute.xlu0 %1283
    %1285 = vrot.lane.b32.xlu0 %v1274, 94
    %v1286 = vpop.permute.xlu0 %1285
    %1287 = vrot.lane.b32.xlu0 %v1275, 94
    %v1288 = vpop.permute.xlu0 %1287
    %1289 = vrot.lane.b32.xlu0 %v1276, 94
    %v1290 = vpop.permute.xlu0 %1289
    %1291 = vrot.lane.b32.xlu0 %v1277, 94
    %v1292 = vpop.permute.xlu0 %1291
    %vm1293 = vcmask 769024
    %v1294 = vsel %vm1293, %v1284, %v1286
    %v1295 = vsel %vm1293, %v1286, %v1288
    %v1296 = vsel %vm1293, %v1288, %v1290
    %v1297 = vsel %vm1293, %v1290, %v1292
    %v1302 = vadd.f32 %v1227, %v1294
    %v1303 = vadd.f32 %v1228, %v1295
    %v1304 = vadd.f32 %v1229, %v1296
    %v1305 = vadd.f32 %v1230, %v1297
    %1306 = vset.pattern.permute.xlu0 35
    %1307 = vperm.xlu0 %1306, %v36
    %v1308 = vpop.permute.xlu0 %1307
    %v1310 = vmul.f32 %v37, %v1308
    %v1311 = vmul.f32 %v38, %v1308
    %v1312 = vmul.f32 %v39, %v1308
    %v1313 = vmul.f32 %v40, %v1308
    %v1314 = vmul.f32 %v41, %v1308
    %1320 = vrot.lane.b32.xlu0 %v1310, 94
    %v1321 = vpop.permute.xlu0 %1320
    %1322 = vrot.lane.b32.xlu0 %v1311, 94
    %v1323 = vpop.permute.xlu0 %1322
    %1324 = vrot.lane.b32.xlu0 %v1312, 94
    %v1325 = vpop.permute.xlu0 %1324
    %1326 = vrot.lane.b32.xlu0 %v1313, 94
    %v1327 = vpop.permute.xlu0 %1326
    %1328 = vrot.lane.b32.xlu0 %v1314, 94
    %v1329 = vpop.permute.xlu0 %1328
    %v1330 = vsel %vm1293, %v1321, %v1323
    %v1331 = vsel %vm1293, %v1323, %v1325
    %v1332 = vsel %vm1293, %v1325, %v1327
    %v1333 = vsel %vm1293, %v1327, %v1329
    %v1339 = vadd.f32 %v1264, %v1330
    %v1340 = vadd.f32 %v1265, %v1331
    %v1341 = vadd.f32 %v1266, %v1332
    %v1342 = vadd.f32 %v1267, %v1333
    %v1343 = vadd.f32 %v1268, %v1329
    %1344 = vset.pattern.permute.xlu0 36
    %1345 = vperm.xlu0 %1344, %v36
    %v1346 = vpop.permute.xlu0 %1345
    %v1348 = vmul.f32 %v37, %v1346
    %v1349 = vmul.f32 %v38, %v1346
    %v1350 = vmul.f32 %v39, %v1346
    %v1351 = vmul.f32 %v40, %v1346
    %v1352 = vmul.f32 %v41, %v1346
    %1358 = vrot.lane.b32.xlu0 %v1348, 92
    %v1359 = vpop.permute.xlu0 %1358
    %1360 = vrot.lane.b32.xlu0 %v1349, 92
    %v1361 = vpop.permute.xlu0 %1360
    %1362 = vrot.lane.b32.xlu0 %v1350, 92
    %v1363 = vpop.permute.xlu0 %1362
    %1364 = vrot.lane.b32.xlu0 %v1351, 92
    %v1365 = vpop.permute.xlu0 %1364
    %1366 = vrot.lane.b32.xlu0 %v1352, 92
    %v1367 = vpop.permute.xlu0 %1366
    %vm1368 = vcmask 752640
    %v1369 = vsel %vm1368, %v1359, %v1361
    %v1370 = vsel %vm1368, %v1361, %v1363
    %v1371 = vsel %vm1368, %v1363, %v1365
    %v1372 = vsel %vm1368, %v1365, %v1367
    %v1377 = vadd.f32 %v1302, %v1369
    %v1378 = vadd.f32 %v1303, %v1370
    %v1379 = vadd.f32 %v1304, %v1371
    %v1380 = vadd.f32 %v1305, %v1372
    %1381 = vset.pattern.permute.xlu0 37
    %1382 = vperm.xlu0 %1381, %v36
    %v1383 = vpop.permute.xlu0 %1382
    %v1385 = vmul.f32 %v37, %v1383
    %v1386 = vmul.f32 %v38, %v1383
    %v1387 = vmul.f32 %v39, %v1383
    %v1388 = vmul.f32 %v40, %v1383
    %v1389 = vmul.f32 %v41, %v1383
    %1395 = vrot.lane.b32.xlu0 %v1385, 92
    %v1396 = vpop.permute.xlu0 %1395
    %1397 = vrot.lane.b32.xlu0 %v1386, 92
    %v1398 = vpop.permute.xlu0 %1397
    %1399 = vrot.lane.b32.xlu0 %v1387, 92
    %v1400 = vpop.permute.xlu0 %1399
    %1401 = vrot.lane.b32.xlu0 %v1388, 92
    %v1402 = vpop.permute.xlu0 %1401
    %1403 = vrot.lane.b32.xlu0 %v1389, 92
    %v1404 = vpop.permute.xlu0 %1403
    %v1405 = vsel %vm1368, %v1396, %v1398
    %v1406 = vsel %vm1368, %v1398, %v1400
    %v1407 = vsel %vm1368, %v1400, %v1402
    %v1408 = vsel %vm1368, %v1402, %v1404
    %v1414 = vadd.f32 %v1339, %v1405
    %v1415 = vadd.f32 %v1340, %v1406
    %v1416 = vadd.f32 %v1341, %v1407
    %v1417 = vadd.f32 %v1342, %v1408
    %v1418 = vadd.f32 %v1343, %v1404
    %1419 = vset.pattern.permute.xlu0 38
    %1420 = vperm.xlu0 %1419, %v36
    %v1421 = vpop.permute.xlu0 %1420
    %v1423 = vmul.f32 %v37, %v1421
    %v1424 = vmul.f32 %v38, %v1421
    %v1425 = vmul.f32 %v39, %v1421
    %v1426 = vmul.f32 %v40, %v1421
    %v1427 = vmul.f32 %v41, %v1421
    %1433 = vrot.lane.b32.xlu0 %v1423, 90
    %v1434 = vpop.permute.xlu0 %1433
    %1435 = vrot.lane.b32.xlu0 %v1424, 90
    %v1436 = vpop.permute.xlu0 %1435
    %1437 = vrot.lane.b32.xlu0 %v1425, 90
    %v1438 = vpop.permute.xlu0 %1437
    %1439 = vrot.lane.b32.xlu0 %v1426, 90
    %v1440 = vpop.permute.xlu0 %1439
    %1441 = vrot.lane.b32.xlu0 %v1427, 90
    %v1442 = vpop.permute.xlu0 %1441
    %vm1443 = vcmask 736256
    %v1444 = vsel %vm1443, %v1434, %v1436
    %v1445 = vsel %vm1443, %v1436, %v1438
    %v1446 = vsel %vm1443, %v1438, %v1440
    %v1447 = vsel %vm1443, %v1440, %v1442
    %v1452 = vadd.f32 %v1377, %v1444
    %v1453 = vadd.f32 %v1378, %v1445
    %v1454 = vadd.f32 %v1379, %v1446
    %v1455 = vadd.f32 %v1380, %v1447
    %1456 = vset.pattern.permute.xlu0 39
    %1457 = vperm.xlu0 %1456, %v36
    %v1458 = vpop.permute.xlu0 %1457
    %v1460 = vmul.f32 %v37, %v1458
    %v1461 = vmul.f32 %v38, %v1458
    %v1462 = vmul.f32 %v39, %v1458
    %v1463 = vmul.f32 %v40, %v1458
    %v1464 = vmul.f32 %v41, %v1458
    %1470 = vrot.lane.b32.xlu0 %v1460, 90
    %v1471 = vpop.permute.xlu0 %1470
    %1472 = vrot.lane.b32.xlu0 %v1461, 90
    %v1473 = vpop.permute.xlu0 %1472
    %1474 = vrot.lane.b32.xlu0 %v1462, 90
    %v1475 = vpop.permute.xlu0 %1474
    %1476 = vrot.lane.b32.xlu0 %v1463, 90
    %v1477 = vpop.permute.xlu0 %1476
    %1478 = vrot.lane.b32.xlu0 %v1464, 90
    %v1479 = vpop.permute.xlu0 %1478
    %v1480 = vsel %vm1443, %v1471, %v1473
    %v1481 = vsel %vm1443, %v1473, %v1475
    %v1482 = vsel %vm1443, %v1475, %v1477
    %v1483 = vsel %vm1443, %v1477, %v1479
    %v1489 = vadd.f32 %v1414, %v1480
    %v1490 = vadd.f32 %v1415, %v1481
    %v1491 = vadd.f32 %v1416, %v1482
    %v1492 = vadd.f32 %v1417, %v1483
    %v1493 = vadd.f32 %v1418, %v1479
    %1494 = vset.pattern.permute.xlu0 40
    %1495 = vperm.xlu0 %1494, %v36
    %v1496 = vpop.permute.xlu0 %1495
    %v1498 = vmul.f32 %v37, %v1496
    %v1499 = vmul.f32 %v38, %v1496
    %v1500 = vmul.f32 %v39, %v1496
    %v1501 = vmul.f32 %v40, %v1496
    %v1502 = vmul.f32 %v41, %v1496
    %1508 = vrot.lane.b32.xlu0 %v1498, 88
    %v1509 = vpop.permute.xlu0 %1508
    %1510 = vrot.lane.b32.xlu0 %v1499, 88
    %v1511 = vpop.permute.xlu0 %1510
    %1512 = vrot.lane.b32.xlu0 %v1500, 88
    %v1513 = vpop.permute.xlu0 %1512
    %1514 = vrot.lane.b32.xlu0 %v1501, 88
    %v1515 = vpop.permute.xlu0 %1514
    %1516 = vrot.lane.b32.xlu0 %v1502, 88
    %v1517 = vpop.permute.xlu0 %1516
    %vm1518 = vcmask 719872
    %v1519 = vsel %vm1518, %v1509, %v1511
    %v1520 = vsel %vm1518, %v1511, %v1513
    %v1521 = vsel %vm1518, %v1513, %v1515
    %v1522 = vsel %vm1518, %v1515, %v1517
    %v1527 = vadd.f32 %v1452, %v1519
    %v1528 = vadd.f32 %v1453, %v1520
    %v1529 = vadd.f32 %v1454, %v1521
    %v1530 = vadd.f32 %v1455, %v1522
    %1531 = vset.pattern.permute.xlu0 41
    %1532 = vperm.xlu0 %1531, %v36
    %v1533 = vpop.permute.xlu0 %1532
    %v1535 = vmul.f32 %v37, %v1533
    %v1536 = vmul.f32 %v38, %v1533
    %v1537 = vmul.f32 %v39, %v1533
    %v1538 = vmul.f32 %v40, %v1533
    %v1539 = vmul.f32 %v41, %v1533
    %1545 = vrot.lane.b32.xlu0 %v1535, 88
    %v1546 = vpop.permute.xlu0 %1545
    %1547 = vrot.lane.b32.xlu0 %v1536, 88
    %v1548 = vpop.permute.xlu0 %1547
    %1549 = vrot.lane.b32.xlu0 %v1537, 88
    %v1550 = vpop.permute.xlu0 %1549
    %1551 = vrot.lane.b32.xlu0 %v1538, 88
    %v1552 = vpop.permute.xlu0 %1551
    %1553 = vrot.lane.b32.xlu0 %v1539, 88
    %v1554 = vpop.permute.xlu0 %1553
    %v1555 = vsel %vm1518, %v1546, %v1548
    %v1556 = vsel %vm1518, %v1548, %v1550
    %v1557 = vsel %vm1518, %v1550, %v1552
    %v1558 = vsel %vm1518, %v1552, %v1554
    %v1564 = vadd.f32 %v1489, %v1555
    %v1565 = vadd.f32 %v1490, %v1556
    %v1566 = vadd.f32 %v1491, %v1557
    %v1567 = vadd.f32 %v1492, %v1558
    %v1568 = vadd.f32 %v1493, %v1554
    %1569 = vset.pattern.permute.xlu0 42
    %1570 = vperm.xlu0 %1569, %v36
    %v1571 = vpop.permute.xlu0 %1570
    %v1573 = vmul.f32 %v37, %v1571
    %v1574 = vmul.f32 %v38, %v1571
    %v1575 = vmul.f32 %v39, %v1571
    %v1576 = vmul.f32 %v40, %v1571
    %v1577 = vmul.f32 %v41, %v1571
    %1583 = vrot.lane.b32.xlu0 %v1573, 86
    %v1584 = vpop.permute.xlu0 %1583
    %1585 = vrot.lane.b32.xlu0 %v1574, 86
    %v1586 = vpop.permute.xlu0 %1585
    %1587 = vrot.lane.b32.xlu0 %v1575, 86
    %v1588 = vpop.permute.xlu0 %1587
    %1589 = vrot.lane.b32.xlu0 %v1576, 86
    %v1590 = vpop.permute.xlu0 %1589
    %1591 = vrot.lane.b32.xlu0 %v1577, 86
    %v1592 = vpop.permute.xlu0 %1591
    %vm1593 = vcmask 703488
    %v1594 = vsel %vm1593, %v1584, %v1586
    %v1595 = vsel %vm1593, %v1586, %v1588
    %v1596 = vsel %vm1593, %v1588, %v1590
    %v1597 = vsel %vm1593, %v1590, %v1592
    %v1602 = vadd.f32 %v1527, %v1594
    %v1603 = vadd.f32 %v1528, %v1595
    %v1604 = vadd.f32 %v1529, %v1596
    %v1605 = vadd.f32 %v1530, %v1597
    %1606 = vset.pattern.permute.xlu0 43
    %1607 = vperm.xlu0 %1606, %v36
    %v1608 = vpop.permute.xlu0 %1607
    %v1610 = vmul.f32 %v37, %v1608
    %v1611 = vmul.f32 %v38, %v1608
    %v1612 = vmul.f32 %v39, %v1608
    %v1613 = vmul.f32 %v40, %v1608
    %v1614 = vmul.f32 %v41, %v1608
    %1620 = vrot.lane.b32.xlu0 %v1610, 86
    %v1621 = vpop.permute.xlu0 %1620
    %1622 = vrot.lane.b32.xlu0 %v1611, 86
    %v1623 = vpop.permute.xlu0 %1622
    %1624 = vrot.lane.b32.xlu0 %v1612, 86
    %v1625 = vpop.permute.xlu0 %1624
    %1626 = vrot.lane.b32.xlu0 %v1613, 86
    %v1627 = vpop.permute.xlu0 %1626
    %1628 = vrot.lane.b32.xlu0 %v1614, 86
    %v1629 = vpop.permute.xlu0 %1628
    %v1630 = vsel %vm1593, %v1621, %v1623
    %v1631 = vsel %vm1593, %v1623, %v1625
    %v1632 = vsel %vm1593, %v1625, %v1627
    %v1633 = vsel %vm1593, %v1627, %v1629
    %v1639 = vadd.f32 %v1564, %v1630
    %v1640 = vadd.f32 %v1565, %v1631
    %v1641 = vadd.f32 %v1566, %v1632
    %v1642 = vadd.f32 %v1567, %v1633
    %v1643 = vadd.f32 %v1568, %v1629
    %1644 = vset.pattern.permute.xlu0 44
    %1645 = vperm.xlu0 %1644, %v36
    %v1646 = vpop.permute.xlu0 %1645
    %v1648 = vmul.f32 %v37, %v1646
    %v1649 = vmul.f32 %v38, %v1646
    %v1650 = vmul.f32 %v39, %v1646
    %v1651 = vmul.f32 %v40, %v1646
    %v1652 = vmul.f32 %v41, %v1646
    %1658 = vrot.lane.b32.xlu0 %v1648, 84
    %v1659 = vpop.permute.xlu0 %1658
    %1660 = vrot.lane.b32.xlu0 %v1649, 84
    %v1661 = vpop.permute.xlu0 %1660
    %1662 = vrot.lane.b32.xlu0 %v1650, 84
    %v1663 = vpop.permute.xlu0 %1662
    %1664 = vrot.lane.b32.xlu0 %v1651, 84
    %v1665 = vpop.permute.xlu0 %1664
    %1666 = vrot.lane.b32.xlu0 %v1652, 84
    %v1667 = vpop.permute.xlu0 %1666
    %vm1668 = vcmask 687104
    %v1669 = vsel %vm1668, %v1659, %v1661
    %v1670 = vsel %vm1668, %v1661, %v1663
    %v1671 = vsel %vm1668, %v1663, %v1665
    %v1672 = vsel %vm1668, %v1665, %v1667
    %v1677 = vadd.f32 %v1602, %v1669
    %v1678 = vadd.f32 %v1603, %v1670
    %v1679 = vadd.f32 %v1604, %v1671
    %v1680 = vadd.f32 %v1605, %v1672
    %1681 = vset.pattern.permute.xlu0 45
    %1682 = vperm.xlu0 %1681, %v36
    %v1683 = vpop.permute.xlu0 %1682
    %v1685 = vmul.f32 %v37, %v1683
    %v1686 = vmul.f32 %v38, %v1683
    %v1687 = vmul.f32 %v39, %v1683
    %v1688 = vmul.f32 %v40, %v1683
    %v1689 = vmul.f32 %v41, %v1683
    %1695 = vrot.lane.b32.xlu0 %v1685, 84
    %v1696 = vpop.permute.xlu0 %1695
    %1697 = vrot.lane.b32.xlu0 %v1686, 84
    %v1698 = vpop.permute.xlu0 %1697
    %1699 = vrot.lane.b32.xlu0 %v1687, 84
    %v1700 = vpop.permute.xlu0 %1699
    %1701 = vrot.lane.b32.xlu0 %v1688, 84
    %v1702 = vpop.permute.xlu0 %1701
    %1703 = vrot.lane.b32.xlu0 %v1689, 84
    %v1704 = vpop.permute.xlu0 %1703
    %v1705 = vsel %vm1668, %v1696, %v1698
    %v1706 = vsel %vm1668, %v1698, %v1700
    %v1707 = vsel %vm1668, %v1700, %v1702
    %v1708 = vsel %vm1668, %v1702, %v1704
    %v1714 = vadd.f32 %v1639, %v1705
    %v1715 = vadd.f32 %v1640, %v1706
    %v1716 = vadd.f32 %v1641, %v1707
    %v1717 = vadd.f32 %v1642, %v1708
    %v1718 = vadd.f32 %v1643, %v1704
    %1719 = vset.pattern.permute.xlu0 46
    %1720 = vperm.xlu0 %1719, %v36
    %v1721 = vpop.permute.xlu0 %1720
    %v1723 = vmul.f32 %v37, %v1721
    %v1724 = vmul.f32 %v38, %v1721
    %v1725 = vmul.f32 %v39, %v1721
    %v1726 = vmul.f32 %v40, %v1721
    %v1727 = vmul.f32 %v41, %v1721
    %1733 = vrot.lane.b32.xlu0 %v1723, 82
    %v1734 = vpop.permute.xlu0 %1733
    %1735 = vrot.lane.b32.xlu0 %v1724, 82
    %v1736 = vpop.permute.xlu0 %1735
    %1737 = vrot.lane.b32.xlu0 %v1725, 82
    %v1738 = vpop.permute.xlu0 %1737
    %1739 = vrot.lane.b32.xlu0 %v1726, 82
    %v1740 = vpop.permute.xlu0 %1739
    %1741 = vrot.lane.b32.xlu0 %v1727, 82
    %v1742 = vpop.permute.xlu0 %1741
    %vm1743 = vcmask 670720
    %v1744 = vsel %vm1743, %v1734, %v1736
    %v1745 = vsel %vm1743, %v1736, %v1738
    %v1746 = vsel %vm1743, %v1738, %v1740
    %v1747 = vsel %vm1743, %v1740, %v1742
    %v1752 = vadd.f32 %v1677, %v1744
    %v1753 = vadd.f32 %v1678, %v1745
    %v1754 = vadd.f32 %v1679, %v1746
    %v1755 = vadd.f32 %v1680, %v1747
    %1756 = vset.pattern.permute.xlu0 47
    %1757 = vperm.xlu0 %1756, %v36
    %v1758 = vpop.permute.xlu0 %1757
    %v1760 = vmul.f32 %v37, %v1758
    %v1761 = vmul.f32 %v38, %v1758
    %v1762 = vmul.f32 %v39, %v1758
    %v1763 = vmul.f32 %v40, %v1758
    %v1764 = vmul.f32 %v41, %v1758
    %1770 = vrot.lane.b32.xlu0 %v1760, 82
    %v1771 = vpop.permute.xlu0 %1770
    %1772 = vrot.lane.b32.xlu0 %v1761, 82
    %v1773 = vpop.permute.xlu0 %1772
    %1774 = vrot.lane.b32.xlu0 %v1762, 82
    %v1775 = vpop.permute.xlu0 %1774
    %1776 = vrot.lane.b32.xlu0 %v1763, 82
    %v1777 = vpop.permute.xlu0 %1776
    %1778 = vrot.lane.b32.xlu0 %v1764, 82
    %v1779 = vpop.permute.xlu0 %1778
    %v1780 = vsel %vm1743, %v1771, %v1773
    %v1781 = vsel %vm1743, %v1773, %v1775
    %v1782 = vsel %vm1743, %v1775, %v1777
    %v1783 = vsel %vm1743, %v1777, %v1779
    %v1789 = vadd.f32 %v1714, %v1780
    %v1790 = vadd.f32 %v1715, %v1781
    %v1791 = vadd.f32 %v1716, %v1782
    %v1792 = vadd.f32 %v1717, %v1783
    %v1793 = vadd.f32 %v1718, %v1779
    %1794 = vset.pattern.permute.xlu0 48
    %1795 = vperm.xlu0 %1794, %v36
    %v1796 = vpop.permute.xlu0 %1795
    %v1798 = vmul.f32 %v37, %v1796
    %v1799 = vmul.f32 %v38, %v1796
    %v1800 = vmul.f32 %v39, %v1796
    %v1801 = vmul.f32 %v40, %v1796
    %v1802 = vmul.f32 %v41, %v1796
    %1808 = vrot.lane.b32.xlu0 %v1798, 80
    %v1809 = vpop.permute.xlu0 %1808
    %1810 = vrot.lane.b32.xlu0 %v1799, 80
    %v1811 = vpop.permute.xlu0 %1810
    %1812 = vrot.lane.b32.xlu0 %v1800, 80
    %v1813 = vpop.permute.xlu0 %1812
    %1814 = vrot.lane.b32.xlu0 %v1801, 80
    %v1815 = vpop.permute.xlu0 %1814
    %1816 = vrot.lane.b32.xlu0 %v1802, 80
    %v1817 = vpop.permute.xlu0 %1816
    %vm1818 = vcmask 654336
    %v1819 = vsel %vm1818, %v1809, %v1811
    %v1820 = vsel %vm1818, %v1811, %v1813
    %v1821 = vsel %vm1818, %v1813, %v1815
    %v1822 = vsel %vm1818, %v1815, %v1817
    %v1827 = vadd.f32 %v1752, %v1819
    %v1828 = vadd.f32 %v1753, %v1820
    %v1829 = vadd.f32 %v1754, %v1821
    %v1830 = vadd.f32 %v1755, %v1822
    %1831 = vset.pattern.permute.xlu0 49
    %1832 = vperm.xlu0 %1831, %v36
    %v1833 = vpop.permute.xlu0 %1832
    %v1835 = vmul.f32 %v37, %v1833
    %v1836 = vmul.f32 %v38, %v1833
    %v1837 = vmul.f32 %v39, %v1833
    %v1838 = vmul.f32 %v40, %v1833
    %v1839 = vmul.f32 %v41, %v1833
    %1845 = vrot.lane.b32.xlu0 %v1835, 80
    %v1846 = vpop.permute.xlu0 %1845
    %1847 = vrot.lane.b32.xlu0 %v1836, 80
    %v1848 = vpop.permute.xlu0 %1847
    %1849 = vrot.lane.b32.xlu0 %v1837, 80
    %v1850 = vpop.permute.xlu0 %1849
    %1851 = vrot.lane.b32.xlu0 %v1838, 80
    %v1852 = vpop.permute.xlu0 %1851
    %1853 = vrot.lane.b32.xlu0 %v1839, 80
    %v1854 = vpop.permute.xlu0 %1853
    %v1855 = vsel %vm1818, %v1846, %v1848
    %v1856 = vsel %vm1818, %v1848, %v1850
    %v1857 = vsel %vm1818, %v1850, %v1852
    %v1858 = vsel %vm1818, %v1852, %v1854
    %v1864 = vadd.f32 %v1789, %v1855
    %v1865 = vadd.f32 %v1790, %v1856
    %v1866 = vadd.f32 %v1791, %v1857
    %v1867 = vadd.f32 %v1792, %v1858
    %v1868 = vadd.f32 %v1793, %v1854
    %1869 = vset.pattern.permute.xlu0 50
    %1870 = vperm.xlu0 %1869, %v36
    %v1871 = vpop.permute.xlu0 %1870
    %v1873 = vmul.f32 %v37, %v1871
    %v1874 = vmul.f32 %v38, %v1871
    %v1875 = vmul.f32 %v39, %v1871
    %v1876 = vmul.f32 %v40, %v1871
    %v1877 = vmul.f32 %v41, %v1871
    %1883 = vrot.lane.b32.xlu0 %v1873, 78
    %v1884 = vpop.permute.xlu0 %1883
    %1885 = vrot.lane.b32.xlu0 %v1874, 78
    %v1886 = vpop.permute.xlu0 %1885
    %1887 = vrot.lane.b32.xlu0 %v1875, 78
    %v1888 = vpop.permute.xlu0 %1887
    %1889 = vrot.lane.b32.xlu0 %v1876, 78
    %v1890 = vpop.permute.xlu0 %1889
    %1891 = vrot.lane.b32.xlu0 %v1877, 78
    %v1892 = vpop.permute.xlu0 %1891
    %vm1893 = vcmask 637952
    %v1894 = vsel %vm1893, %v1884, %v1886
    %v1895 = vsel %vm1893, %v1886, %v1888
    %v1896 = vsel %vm1893, %v1888, %v1890
    %v1897 = vsel %vm1893, %v1890, %v1892
    %v1902 = vadd.f32 %v1827, %v1894
    %v1903 = vadd.f32 %v1828, %v1895
    %v1904 = vadd.f32 %v1829, %v1896
    %v1905 = vadd.f32 %v1830, %v1897
    %1906 = vset.pattern.permute.xlu0 51
    %1907 = vperm.xlu0 %1906, %v36
    %v1908 = vpop.permute.xlu0 %1907
    %v1910 = vmul.f32 %v37, %v1908
    %v1911 = vmul.f32 %v38, %v1908
    %v1912 = vmul.f32 %v39, %v1908
    %v1913 = vmul.f32 %v40, %v1908
    %v1914 = vmul.f32 %v41, %v1908
    %1920 = vrot.lane.b32.xlu0 %v1910, 78
    %v1921 = vpop.permute.xlu0 %1920
    %1922 = vrot.lane.b32.xlu0 %v1911, 78
    %v1923 = vpop.permute.xlu0 %1922
    %1924 = vrot.lane.b32.xlu0 %v1912, 78
    %v1925 = vpop.permute.xlu0 %1924
    %1926 = vrot.lane.b32.xlu0 %v1913, 78
    %v1927 = vpop.permute.xlu0 %1926
    %1928 = vrot.lane.b32.xlu0 %v1914, 78
    %v1929 = vpop.permute.xlu0 %1928
    %v1930 = vsel %vm1893, %v1921, %v1923
    %v1931 = vsel %vm1893, %v1923, %v1925
    %v1932 = vsel %vm1893, %v1925, %v1927
    %v1933 = vsel %vm1893, %v1927, %v1929
    %v1939 = vadd.f32 %v1864, %v1930
    %v1940 = vadd.f32 %v1865, %v1931
    %v1941 = vadd.f32 %v1866, %v1932
    %v1942 = vadd.f32 %v1867, %v1933
    %v1943 = vadd.f32 %v1868, %v1929
    %1944 = vset.pattern.permute.xlu0 52
    %1945 = vperm.xlu0 %1944, %v36
    %v1946 = vpop.permute.xlu0 %1945
    %v1948 = vmul.f32 %v37, %v1946
    %v1949 = vmul.f32 %v38, %v1946
    %v1950 = vmul.f32 %v39, %v1946
    %v1951 = vmul.f32 %v40, %v1946
    %v1952 = vmul.f32 %v41, %v1946
    %1958 = vrot.lane.b32.xlu0 %v1948, 76
    %v1959 = vpop.permute.xlu0 %1958
    %1960 = vrot.lane.b32.xlu0 %v1949, 76
    %v1961 = vpop.permute.xlu0 %1960
    %1962 = vrot.lane.b32.xlu0 %v1950, 76
    %v1963 = vpop.permute.xlu0 %1962
    %1964 = vrot.lane.b32.xlu0 %v1951, 76
    %v1965 = vpop.permute.xlu0 %1964
    %1966 = vrot.lane.b32.xlu0 %v1952, 76
    %v1967 = vpop.permute.xlu0 %1966
    %vm1968 = vcmask 621568
    %v1969 = vsel %vm1968, %v1959, %v1961
    %v1970 = vsel %vm1968, %v1961, %v1963
    %v1971 = vsel %vm1968, %v1963, %v1965
    %v1972 = vsel %vm1968, %v1965, %v1967
    %v1977 = vadd.f32 %v1902, %v1969
    %v1978 = vadd.f32 %v1903, %v1970
    %v1979 = vadd.f32 %v1904, %v1971
    %v1980 = vadd.f32 %v1905, %v1972
    %1981 = vset.pattern.permute.xlu0 53
    %1982 = vperm.xlu0 %1981, %v36
    %v1983 = vpop.permute.xlu0 %1982
    %v1985 = vmul.f32 %v37, %v1983
    %v1986 = vmul.f32 %v38, %v1983
    %v1987 = vmul.f32 %v39, %v1983
    %v1988 = vmul.f32 %v40, %v1983
    %v1989 = vmul.f32 %v41, %v1983
    %1995 = vrot.lane.b32.xlu0 %v1985, 76
    %v1996 = vpop.permute.xlu0 %1995
    %1997 = vrot.lane.b32.xlu0 %v1986, 76
    %v1998 = vpop.permute.xlu0 %1997
    %1999 = vrot.lane.b32.xlu0 %v1987, 76
    %v2000 = vpop.permute.xlu0 %1999
    %2001 = vrot.lane.b32.xlu0 %v1988, 76
    %v2002 = vpop.permute.xlu0 %2001
    %2003 = vrot.lane.b32.xlu0 %v1989, 76
    %v2004 = vpop.permute.xlu0 %2003
    %v2005 = vsel %vm1968, %v1996, %v1998
    %v2006 = vsel %vm1968, %v1998, %v2000
    %v2007 = vsel %vm1968, %v2000, %v2002
    %v2008 = vsel %vm1968, %v2002, %v2004
    %v2014 = vadd.f32 %v1939, %v2005
    %v2015 = vadd.f32 %v1940, %v2006
    %v2016 = vadd.f32 %v1941, %v2007
    %v2017 = vadd.f32 %v1942, %v2008
    %v2018 = vadd.f32 %v1943, %v2004
    %2019 = vset.pattern.permute.xlu0 54
    %2020 = vperm.xlu0 %2019, %v36
    %v2021 = vpop.permute.xlu0 %2020
    %v2023 = vmul.f32 %v37, %v2021
    %v2024 = vmul.f32 %v38, %v2021
    %v2025 = vmul.f32 %v39, %v2021
    %v2026 = vmul.f32 %v40, %v2021
    %v2027 = vmul.f32 %v41, %v2021
    %2033 = vrot.lane.b32.xlu0 %v2023, 74
    %v2034 = vpop.permute.xlu0 %2033
    %2035 = vrot.lane.b32.xlu0 %v2024, 74
    %v2036 = vpop.permute.xlu0 %2035
    %2037 = vrot.lane.b32.xlu0 %v2025, 74
    %v2038 = vpop.permute.xlu0 %2037
    %2039 = vrot.lane.b32.xlu0 %v2026, 74
    %v2040 = vpop.permute.xlu0 %2039
    %2041 = vrot.lane.b32.xlu0 %v2027, 74
    %v2042 = vpop.permute.xlu0 %2041
    %vm2043 = vcmask 605184
    %v2044 = vsel %vm2043, %v2034, %v2036
    %v2045 = vsel %vm2043, %v2036, %v2038
    %v2046 = vsel %vm2043, %v2038, %v2040
    %v2047 = vsel %vm2043, %v2040, %v2042
    %v2052 = vadd.f32 %v1977, %v2044
    %v2053 = vadd.f32 %v1978, %v2045
    %v2054 = vadd.f32 %v1979, %v2046
    %v2055 = vadd.f32 %v1980, %v2047
    %2056 = vset.pattern.permute.xlu0 55
    %2057 = vperm.xlu0 %2056, %v36
    %v2058 = vpop.permute.xlu0 %2057
    %v2060 = vmul.f32 %v37, %v2058
    %v2061 = vmul.f32 %v38, %v2058
    %v2062 = vmul.f32 %v39, %v2058
    %v2063 = vmul.f32 %v40, %v2058
    %v2064 = vmul.f32 %v41, %v2058
    %2070 = vrot.lane.b32.xlu0 %v2060, 74
    %v2071 = vpop.permute.xlu0 %2070
    %2072 = vrot.lane.b32.xlu0 %v2061, 74
    %v2073 = vpop.permute.xlu0 %2072
    %2074 = vrot.lane.b32.xlu0 %v2062, 74
    %v2075 = vpop.permute.xlu0 %2074
    %2076 = vrot.lane.b32.xlu0 %v2063, 74
    %v2077 = vpop.permute.xlu0 %2076
    %2078 = vrot.lane.b32.xlu0 %v2064, 74
    %v2079 = vpop.permute.xlu0 %2078
    %v2080 = vsel %vm2043, %v2071, %v2073
    %v2081 = vsel %vm2043, %v2073, %v2075
    %v2082 = vsel %vm2043, %v2075, %v2077
    %v2083 = vsel %vm2043, %v2077, %v2079
    %v2089 = vadd.f32 %v2014, %v2080
    %v2090 = vadd.f32 %v2015, %v2081
    %v2091 = vadd.f32 %v2016, %v2082
    %v2092 = vadd.f32 %v2017, %v2083
    %v2093 = vadd.f32 %v2018, %v2079
    %2094 = vset.pattern.permute.xlu0 56
    %2095 = vperm.xlu0 %2094, %v36
    %v2096 = vpop.permute.xlu0 %2095
    %v2098 = vmul.f32 %v37, %v2096
    %v2099 = vmul.f32 %v38, %v2096
    %v2100 = vmul.f32 %v39, %v2096
    %v2101 = vmul.f32 %v40, %v2096
    %v2102 = vmul.f32 %v41, %v2096
    %2108 = vrot.lane.b32.xlu0 %v2098, 72
    %v2109 = vpop.permute.xlu0 %2108
    %2110 = vrot.lane.b32.xlu0 %v2099, 72
    %v2111 = vpop.permute.xlu0 %2110
    %2112 = vrot.lane.b32.xlu0 %v2100, 72
    %v2113 = vpop.permute.xlu0 %2112
    %2114 = vrot.lane.b32.xlu0 %v2101, 72
    %v2115 = vpop.permute.xlu0 %2114
    %2116 = vrot.lane.b32.xlu0 %v2102, 72
    %v2117 = vpop.permute.xlu0 %2116
    %vm2118 = vcmask 588800
    %v2119 = vsel %vm2118, %v2109, %v2111
    %v2120 = vsel %vm2118, %v2111, %v2113
    %v2121 = vsel %vm2118, %v2113, %v2115
    %v2122 = vsel %vm2118, %v2115, %v2117
    %v2127 = vadd.f32 %v2052, %v2119
    %v2128 = vadd.f32 %v2053, %v2120
    %v2129 = vadd.f32 %v2054, %v2121
    %v2130 = vadd.f32 %v2055, %v2122
    %2131 = vset.pattern.permute.xlu0 57
    %2132 = vperm.xlu0 %2131, %v36
    %v2133 = vpop.permute.xlu0 %2132
    %v2135 = vmul.f32 %v37, %v2133
    %v2136 = vmul.f32 %v38, %v2133
    %v2137 = vmul.f32 %v39, %v2133
    %v2138 = vmul.f32 %v40, %v2133
    %v2139 = vmul.f32 %v41, %v2133
    %2145 = vrot.lane.b32.xlu0 %v2135, 72
    %v2146 = vpop.permute.xlu0 %2145
    %2147 = vrot.lane.b32.xlu0 %v2136, 72
    %v2148 = vpop.permute.xlu0 %2147
    %2149 = vrot.lane.b32.xlu0 %v2137, 72
    %v2150 = vpop.permute.xlu0 %2149
    %2151 = vrot.lane.b32.xlu0 %v2138, 72
    %v2152 = vpop.permute.xlu0 %2151
    %2153 = vrot.lane.b32.xlu0 %v2139, 72
    %v2154 = vpop.permute.xlu0 %2153
    %v2155 = vsel %vm2118, %v2146, %v2148
    %v2156 = vsel %vm2118, %v2148, %v2150
    %v2157 = vsel %vm2118, %v2150, %v2152
    %v2158 = vsel %vm2118, %v2152, %v2154
    %v2164 = vadd.f32 %v2089, %v2155
    %v2165 = vadd.f32 %v2090, %v2156
    %v2166 = vadd.f32 %v2091, %v2157
    %v2167 = vadd.f32 %v2092, %v2158
    %v2168 = vadd.f32 %v2093, %v2154
    %2169 = vset.pattern.permute.xlu0 58
    %2170 = vperm.xlu0 %2169, %v36
    %v2171 = vpop.permute.xlu0 %2170
    %v2173 = vmul.f32 %v37, %v2171
    %v2174 = vmul.f32 %v38, %v2171
    %v2175 = vmul.f32 %v39, %v2171
    %v2176 = vmul.f32 %v40, %v2171
    %v2177 = vmul.f32 %v41, %v2171
    %2183 = vrot.lane.b32.xlu0 %v2173, 70
    %v2184 = vpop.permute.xlu0 %2183
    %2185 = vrot.lane.b32.xlu0 %v2174, 70
    %v2186 = vpop.permute.xlu0 %2185
    %2187 = vrot.lane.b32.xlu0 %v2175, 70
    %v2188 = vpop.permute.xlu0 %2187
    %2189 = vrot.lane.b32.xlu0 %v2176, 70
    %v2190 = vpop.permute.xlu0 %2189
    %2191 = vrot.lane.b32.xlu0 %v2177, 70
    %v2192 = vpop.permute.xlu0 %2191
    %vm2193 = vcmask 572416
    %v2194 = vsel %vm2193, %v2184, %v2186
    %v2195 = vsel %vm2193, %v2186, %v2188
    %v2196 = vsel %vm2193, %v2188, %v2190
    %v2197 = vsel %vm2193, %v2190, %v2192
    %v2202 = vadd.f32 %v2127, %v2194
    %v2203 = vadd.f32 %v2128, %v2195
    %v2204 = vadd.f32 %v2129, %v2196
    %v2205 = vadd.f32 %v2130, %v2197
    %2206 = vset.pattern.permute.xlu0 59
    %2207 = vperm.xlu0 %2206, %v36
    %v2208 = vpop.permute.xlu0 %2207
    %v2210 = vmul.f32 %v37, %v2208
    %v2211 = vmul.f32 %v38, %v2208
    %v2212 = vmul.f32 %v39, %v2208
    %v2213 = vmul.f32 %v40, %v2208
    %v2214 = vmul.f32 %v41, %v2208
    %2220 = vrot.lane.b32.xlu0 %v2210, 70
    %v2221 = vpop.permute.xlu0 %2220
    %2222 = vrot.lane.b32.xlu0 %v2211, 70
    %v2223 = vpop.permute.xlu0 %2222
    %2224 = vrot.lane.b32.xlu0 %v2212, 70
    %v2225 = vpop.permute.xlu0 %2224
    %2226 = vrot.lane.b32.xlu0 %v2213, 70
    %v2227 = vpop.permute.xlu0 %2226
    %2228 = vrot.lane.b32.xlu0 %v2214, 70
    %v2229 = vpop.permute.xlu0 %2228
    %v2230 = vsel %vm2193, %v2221, %v2223
    %v2231 = vsel %vm2193, %v2223, %v2225
    %v2232 = vsel %vm2193, %v2225, %v2227
    %v2233 = vsel %vm2193, %v2227, %v2229
    %v2239 = vadd.f32 %v2164, %v2230
    %v2240 = vadd.f32 %v2165, %v2231
    %v2241 = vadd.f32 %v2166, %v2232
    %v2242 = vadd.f32 %v2167, %v2233
    %v2243 = vadd.f32 %v2168, %v2229
    %2244 = vset.pattern.permute.xlu0 60
    %2245 = vperm.xlu0 %2244, %v36
    %v2246 = vpop.permute.xlu0 %2245
    %v2248 = vmul.f32 %v37, %v2246
    %v2249 = vmul.f32 %v38, %v2246
    %v2250 = vmul.f32 %v39, %v2246
    %v2251 = vmul.f32 %v40, %v2246
    %v2252 = vmul.f32 %v41, %v2246
    %2258 = vrot.lane.b32.xlu0 %v2248, 68
    %v2259 = vpop.permute.xlu0 %2258
    %2260 = vrot.lane.b32.xlu0 %v2249, 68
    %v2261 = vpop.permute.xlu0 %2260
    %2262 = vrot.lane.b32.xlu0 %v2250, 68
    %v2263 = vpop.permute.xlu0 %2262
    %2264 = vrot.lane.b32.xlu0 %v2251, 68
    %v2265 = vpop.permute.xlu0 %2264
    %2266 = vrot.lane.b32.xlu0 %v2252, 68
    %v2267 = vpop.permute.xlu0 %2266
    %vm2268 = vcmask 556032
    %v2269 = vsel %vm2268, %v2259, %v2261
    %v2270 = vsel %vm2268, %v2261, %v2263
    %v2271 = vsel %vm2268, %v2263, %v2265
    %v2272 = vsel %vm2268, %v2265, %v2267
    %v2277 = vadd.f32 %v2202, %v2269
    %v2278 = vadd.f32 %v2203, %v2270
    %v2279 = vadd.f32 %v2204, %v2271
    %v2280 = vadd.f32 %v2205, %v2272
    %2281 = vset.pattern.permute.xlu0 61
    %2282 = vperm.xlu0 %2281, %v36
    %v2283 = vpop.permute.xlu0 %2282
    %v2285 = vmul.f32 %v37, %v2283
    %v2286 = vmul.f32 %v38, %v2283
    %v2287 = vmul.f32 %v39, %v2283
    %v2288 = vmul.f32 %v40, %v2283
    %v2289 = vmul.f32 %v41, %v2283
    %2295 = vrot.lane.b32.xlu0 %v2285, 68
    %v2296 = vpop.permute.xlu0 %2295
    %2297 = vrot.lane.b32.xlu0 %v2286, 68
    %v2298 = vpop.permute.xlu0 %2297
    %2299 = vrot.lane.b32.xlu0 %v2287, 68
    %v2300 = vpop.permute.xlu0 %2299
    %2301 = vrot.lane.b32.xlu0 %v2288, 68
    %v2302 = vpop.permute.xlu0 %2301
    %2303 = vrot.lane.b32.xlu0 %v2289, 68
    %v2304 = vpop.permute.xlu0 %2303
    %v2305 = vsel %vm2268, %v2296, %v2298
    %v2306 = vsel %vm2268, %v2298, %v2300
    %v2307 = vsel %vm2268, %v2300, %v2302
    %v2308 = vsel %vm2268, %v2302, %v2304
    %v2314 = vadd.f32 %v2239, %v2305
    %v2315 = vadd.f32 %v2240, %v2306
    %v2316 = vadd.f32 %v2241, %v2307
    %v2317 = vadd.f32 %v2242, %v2308
    %v2318 = vadd.f32 %v2243, %v2304
    %2319 = vset.pattern.permute.xlu0 62
    %2320 = vperm.xlu0 %2319, %v36
    %v2321 = vpop.permute.xlu0 %2320
    %v2323 = vmul.f32 %v37, %v2321
    %v2324 = vmul.f32 %v38, %v2321
    %v2325 = vmul.f32 %v39, %v2321
    %v2326 = vmul.f32 %v40, %v2321
    %v2327 = vmul.f32 %v41, %v2321
    %2333 = vrot.lane.b32.xlu0 %v2323, 66
    %v2334 = vpop.permute.xlu0 %2333
    %2335 = vrot.lane.b32.xlu0 %v2324, 66
    %v2336 = vpop.permute.xlu0 %2335
    %2337 = vrot.lane.b32.xlu0 %v2325, 66
    %v2338 = vpop.permute.xlu0 %2337
    %2339 = vrot.lane.b32.xlu0 %v2326, 66
    %v2340 = vpop.permute.xlu0 %2339
    %2341 = vrot.lane.b32.xlu0 %v2327, 66
    %v2342 = vpop.permute.xlu0 %2341
    %vm2343 = vcmask 539648
    %v2344 = vsel %vm2343, %v2334, %v2336
    %v2345 = vsel %vm2343, %v2336, %v2338
    %v2346 = vsel %vm2343, %v2338, %v2340
    %v2347 = vsel %vm2343, %v2340, %v2342
    %v2352 = vadd.f32 %v2277, %v2344
    %v2353 = vadd.f32 %v2278, %v2345
    %v2354 = vadd.f32 %v2279, %v2346
    %v2355 = vadd.f32 %v2280, %v2347
    %2361 = vrot.lane.b32.xlu0 %v2314, 127
    %v2362 = vpop.permute.xlu0 %2361
    %2363 = vrot.lane.b32.xlu0 %v2315, 127
    %v2364 = vpop.permute.xlu0 %2363
    %2365 = vrot.lane.b32.xlu0 %v2316, 127
    %v2366 = vpop.permute.xlu0 %2365
    %2367 = vrot.lane.b32.xlu0 %v2317, 127
    %v2368 = vpop.permute.xlu0 %2367
    %2369 = vrot.lane.b32.xlu0 %v2318, 127
    %v2370 = vpop.permute.xlu0 %2369
    %vm2371 = vcmask 1039360
    %v2372 = vsel %vm2371, %v2362, %v2364
    %v2373 = vsel %vm2371, %v2364, %v2366
    %v2374 = vsel %vm2371, %v2366, %v2368
    %v2375 = vsel %vm2371, %v2368, %v2370
    %v2380 = vadd.f32 %v2352, %v2372
    %v2381 = vadd.f32 %v2353, %v2373
    %v2382 = vadd.f32 %v2354, %v2374
    %v2383 = vadd.f32 %v2355, %v2375
    %2384 = vst [vmem:[#allocation7] sm:$0xff] %v2380
    %2385 = vst [vmem:[#allocation7 + $0x8] sm:$0xff] %v2381
    %2386 = vst [vmem:[#allocation7 + $0x10] sm:$0xff] %v2382
    %2387 = vst [vmem:[#allocation7 + $0x18] sm:$0xff] %v2383
    // Predicated region
    $region18: #{tpu_custom_call.1} parent=1 // pred_check
      _
    $region19: #{tpu_custom_call.1} parent=1 // pred_check_branch
      %2389 = sbr.rel (0) target = $region21
    $region20: #{tpu_custom_call.1} parent=1 // pred_region
      %s2391 = ssub.s32 512, 512
      %2392 = vsyncadd [#allocation4], %s2391
      %s2394 = sshll.u32 [#allocation7], 4
      %s2395 = int_to_ptr.vmem [resolvable:$true] %s2394
      %2397 = dma.vmem_to_hbm [thread:$0]  %s2395, 512, %s2, [#allocation4]
    $region21: #{tpu_custom_call.1} parent=1 // pred_fallthru
      _
    // Predicated region
    $region22: #{tpu_custom_call.1} parent=1 // pred_check
      _
    $region23: #{tpu_custom_call.1} parent=1 // pred_check_branch
      %2399 = sbr.rel (0) target = $region25
    $region24: #{tpu_custom_call.1} parent=1 // pred_region
      %2400 = dma.done [#allocation4], 512
    $region25: #{tpu_custom_call.1} parent=1 // pred_fallthru
      _
    %2401 = vsyncpa [#allocation3], 1
    %2402 = vsyncpa [#allocation6], 1
    %2403 = vsyncpa [#allocation4], 1

</llo_original>
